<compile_context>
chip_gen: v6e
topology: v6e:2x2x1
jax: 0.10.0
libtpu: 0.0.40
codegen_flags: <defaults>
</compile_context>

<pallas_src>
import functools
import math

import jax
import jax.numpy as jnp
from jax import lax
from jax.experimental import pallas as pl
from jax.experimental.pallas import tpu as pltpu


def _gelu_tanh(x):
    # tanh-form GELU: transcendental lands on the EUP; |diff| vs exact erf-GELU < 4e-3.
    c = math.sqrt(2.0 / math.pi)
    return 0.5 * x * (1.0 + jnp.tanh(c * (x + 0.044715 * x * x * x)))


def fno_block_kernel(x_ref, f2_ref, g2re_ref, g2nim_ref, wr_ref, wi_ref, wskip_ref,
                     out_ref, *, bblk, c_in, c_out):
    """One grid step == one batch block of `bblk` elements (batch axis is "parallel")."""
    f32 = jnp.float32
    HW = x_ref.shape[-1]

    xb = x_ref[...]                                             # (Bblk*C, HW) bf16

    # ---- forward 2D DFT (kron-fused): ONE wide bf16 matmul, M = Bblk*C --------------------
    # f2_ref = [Re(F2) | Im(F2)]  -> lane slice at HW (vreg aligned) is free.
    xs = jnp.dot(xb, f2_ref[...], preferred_element_type=f32)   # (Bblk*C, 2*HW) f32
    xs_re = xs[:, :HW].reshape(bblk, c_in, HW)                  # leading-dim split only
    xs_im = xs[:, HW:].reshape(bblk, c_in, HW)

    # ---- SpectralConv, operator_type='diagonal': accumulate over input channels -----------
    # Weights are flat (C*Co, HW) bf16; each channel chunk is cast on use (mixed bf16*f32
    # multiply), so only two (Bblk, Co, HW) f32 accumulators stay live.
    y_re = jnp.zeros((bblk, c_out, HW), f32)
    y_im = jnp.zeros((bblk, c_out, HW), f32)
    # TODO(synk): for large C switch to lax.fori_loop over C-chunks (unroll a few) so the
    # unrolled live ranges stay bounded; C is tiny here so a static unroll is fine.
    for i in range(c_in):
        wr_i = wr_ref[i * c_out:(i + 1) * c_out, :]             # (Co, HW) bf16
        wi_i = wi_ref[i * c_out:(i + 1) * c_out, :]
        xr_i = xs_re[:, i, :][:, None, :]                       # (Bblk, 1, HW) f32
        xi_i = xs_im[:, i, :][:, None, :]
        y_re = y_re + (xr_i * wr_i - xi_i * wi_i)
        y_im = y_im + (xr_i * wi_i + xi_i * wr_i)

    # ---- inverse 2D DFT (real part): two K=HW matmuls summed, no activation concat --------
    y_re2 = y_re.reshape(bblk * c_out, HW).astype(jnp.bfloat16)
    y_im2 = y_im.reshape(bblk * c_out, HW).astype(jnp.bfloat16)
    v = jnp.dot(y_re2, g2re_ref[...], preferred_element_type=f32)
    v = v + jnp.dot(y_im2, g2nim_ref[...], preferred_element_type=f32)   # (Bblk*Co, HW)

    # norm0 is Identity and output_shape_loc == (H, W): zero-fill + copy is a no-op.
    # ---- inner skip (1x1 conv, no bias) as a batched MXU matmul over the batch block ------
    x3 = xb.reshape(bblk, c_in, HW)
    wsk = jnp.broadcast_to(wskip_ref[...], (bblk, c_out, c_in))
    skip = lax.dot_general(wsk, x3,
                           dimension_numbers=(((2,), (1,)), ((0,), (0,))),
                           preferred_element_type=f32)          # (Bblk, Co, HW)
    skip = skip.reshape(bblk * c_out, HW)

    # ---- add, GELU, store (bf16 writeback) -------------------------------------------------
    out_ref[...] = _gelu_tanh(v + skip).astype(out_ref.dtype)
    # norm1 Identity (no-op), drop_path Identity, outer_skip='none', no final activation.


def dft_matrices(n):
    k = jnp.arange(n, dtype=jnp.float32)
    ang = 2.0 * jnp.pi * jnp.mod(jnp.outer(k, k), float(n)) / float(n)
    f_re, f_im = jnp.cos(ang), -jnp.sin(ang)            # forward: exp(-2*pi*i*a*b/n)
    g_re, g_im = jnp.cos(ang) / n, jnp.sin(ang) / n     # inverse: exp(+2*pi*i*a*b/n)/n
    return f_re, f_im, g_re, g_im


def build_params(key, embed_dim, H, W):
    C = embed_dim
    kw, ks = jax.random.split(key)
    # SpectralConv diagonal weight: complex (in, out, modes_lat, modes_lon), std=sqrt(1/C)
    scale = math.sqrt(1.0 / C)
    wsp = scale * jax.random.normal(kw, (C, C, H, W, 2), dtype=jnp.float32)
    wsp_re, wsp_im = wsp[..., 0], wsp[..., 1]
    # inner_skip: Conv2d(C, C, 1, bias=False), std = sqrt(1.0 / embed_dim); layout (out, in)
    wskip = math.sqrt(1.0 / C) * jax.random.normal(ks, (C, C), dtype=jnp.float32)
    return wsp_re, wsp_im, wskip


def fno_block(x, fw_re, fw_im, fh_re, fh_im, gw_re, gw_im, gh_re, gh_im,
              wsp_re, wsp_im, wskip):
    B, C, H, W = x.shape
    Co = wsp_re.shape[1]
    HW = H * W
    bf16 = jnp.bfloat16
    # Guard the lane-dense layout assumption explicitly (review correctness concern).
    assert HW % 128 == 0, "fused layout assumes H*W is a multiple of 128"

    # ---- batch-block size: target M = Bblk*C rows per MXU matmul (256-multiples on
    # v6e/v7x, 128 on v5e); at toy sizes this collapses the grid but still fills more rows.
    target_m = 256
    bblk = max(1, min(B, target_m // max(C, 1)))
    while B % bblk:
        bblk -= 1
    grid = (B // bblk,)

    # ---- operator / parameter setup (plain JAX glue, outside the kernel) ------------------
    Fh = (fh_re + 1j * fh_im).astype(jnp.complex64)   # (H, L)
    Fw = (fw_re + 1j * fw_im).astype(jnp.complex64)   # (W, M)
    Gh = (gh_re + 1j * gh_im).astype(jnp.complex64)   # (L, H)
    Gw = (gw_re + 1j * gw_im).astype(jnp.complex64)   # (M, W)
    F2 = jnp.kron(Fh, Fw)                             # (HW, LM): fused 2D forward DFT
    G2 = jnp.kron(Gh, Gw)                             # (LM, HW): fused 2D inverse DFT
    f2_cat = jnp.concatenate([jnp.real(F2), jnp.imag(F2)], axis=1).astype(bf16)  # (HW, 2HW)
    g2_re = jnp.real(G2).astype(bf16)                 # (HW, HW)
    g2_nim = (-jnp.imag(G2)).astype(bf16)             # (HW, HW)

    # Spectral weights: flat (C*Co, HW) bf16, input-channel-major rows -> lane dense,
    # sublane count a multiple of 16 (no bf16 padding), static per-channel row slices.
    wr = wsp_re.reshape(C, Co, HW).reshape(C * Co, HW).astype(bf16)
    wi = wsp_im.reshape(C, Co, HW).reshape(C * Co, HW).astype(bf16)
    wskip_b = wskip.astype(bf16)                      # (out, in) = (Co, C)

    # bf16 activations in HBM: halves input DMA; flat (B*C, HW) so the batch-block row count
    # (Bblk*C) is a 16-multiple and the block is lane-dense.
    x2 = x.reshape(B * C, HW).astype(bf16)

    def fixed(shape):
        # grid-invariant operand: constant block index, single VMEM buffer (no double buffer)
        return pl.BlockSpec(shape, lambda b: (0,) * len(shape),
                            pipeline_mode=pl.Buffered(1))

    # Explicit scoped-VMEM budget from the actually-resident operands (+ headroom).
    weight_bytes = 2 * (f2_cat.size + g2_re.size + g2_nim.size + wr.size + wi.size
                        + wskip_b.size)
    block_bytes = 2 * 2 * (bblk * C * HW + bblk * Co * HW)       # bf16, double-buffered io
    vmem_limit = int(min(64 << 20, max(32 << 20, weight_bytes + block_bytes + (8 << 20))))

    kernel = functools.partial(fno_block_kernel, bblk=bblk, c_in=C, c_out=Co)

    out = pl.pallas_call(
        kernel,
        out_shape=jax.ShapeDtypeStruct((B * Co, HW), bf16),
        grid=grid,
        in_specs=[
            pl.BlockSpec((bblk * C, HW), lambda b: (b, 0)),      # x: one batch block / step
            fixed((HW, 2 * HW)),                                 # [Re|Im] forward-DFT matrix
            fixed((HW, HW)),                                     # Re(inverse-DFT) matrix
            fixed((HW, HW)),                                     # -Im(inverse-DFT) matrix
            fixed((C * Co, HW)),                                 # spectral weight, real
            fixed((C * Co, HW)),                                 # spectral weight, imag
            fixed((Co, C)),                                      # inner-skip weight
        ],
        out_specs=pl.BlockSpec((bblk * Co, HW), lambda b: (b, 0)),
        compiler_params=pltpu.CompilerParams(
            dimension_semantics=("parallel",),
            vmem_limit_bytes=vmem_limit),
        # TODO(synk): for non-toy C/Co/HW add a "parallel" grid axis over Co tiles (and/or
        # mode chunks) so wr/wi and the inverse-DFT columns stream instead of being resident.
    )(x2, f2_cat, g2_re, g2_nim, wr, wi, wskip_b)
    # metadata-only reshape back to NCHW
    return out.reshape(B, Co, H, W)


def reference(x, fw_re, fw_im, fh_re, fh_im, gw_re, gw_im, gh_re, gh_im,
              wsp_re, wsp_im, wskip):
    hi = jax.lax.Precision.HIGHEST
    Fw = (fw_re + 1j * fw_im).astype(jnp.complex64)
    Fh = (fh_re + 1j * fh_im).astype(jnp.complex64)
    Gw = (gw_re + 1j * gw_im).astype(jnp.complex64)
    Gh = (gh_re + 1j * gh_im).astype(jnp.complex64)
    Wsp = (wsp_re + 1j * wsp_im).astype(jnp.complex64)
    X = jnp.einsum('bchw,wm->bchm', x.astype(jnp.complex64), Fw, precision=hi)
    X = jnp.einsum('bchm,hl->bclm', X, Fh, precision=hi)
    Y = jnp.einsum('bilm,iolm->bolm', X, Wsp, precision=hi)
    T = jnp.einsum('bolm,mw->bolw', Y, Gw, precision=hi)
    V = jnp.real(jnp.einsum('bolw,lh->bohw', T, Gh, precision=hi))
    skip = jnp.einsum('oi,bihw->bohw', wskip, x, precision=hi)
    return jax.nn.gelu(V + skip, approximate=False)


if __name__ == "__main__":
    B, C, H, W = 2, 8, 16, 16       # batch, embed_dim, nlat, nlon  (H*W = 256 lanes)
    key = jax.random.PRNGKey(0)
    kx, kp = jax.random.split(key)
    x = jax.random.normal(kx, (B, C, H, W), dtype=jnp.float32)
    wsp_re, wsp_im, wskip = build_params(kp, C, H, W)
    fw_re, fw_im, gw_re, gw_im = dft_matrices(W)
    fh_re, fh_im, gh_re, gh_im = dft_matrices(H)

    out = fno_block(x, fw_re, fw_im, fh_re, fh_im, gw_re, gw_im, gh_re, gh_im,
                    wsp_re, wsp_im, wskip)
    out = jax.block_until_ready(out)

    ref = reference(x, fw_re, fw_im, fh_re, fh_im, gw_re, gw_im, gh_re, gh_im,
                    wsp_re, wsp_im, wskip)
    out_f32 = out.astype(jnp.float32)
    err = float(jnp.max(jnp.abs(out_f32 - ref)))
    assert bool(jnp.all(jnp.isfinite(out_f32))) and err < 0.15, f"mismatch: max abs err = {err}"
    print("KERNEL_OK")
</pallas_src>

<mosaic_0001>
module attributes {stable_mosaic.version = 11 : i64} {
  func.func @fno_block_kernel(%arg0: i32, %arg1: memref<16x256xbf16, #tpu.memory_space<vmem>>, %arg2: memref<256x512xbf16, #tpu.memory_space<vmem>>, %arg3: memref<256x256xbf16, #tpu.memory_space<vmem>>, %arg4: memref<256x256xbf16, #tpu.memory_space<vmem>>, %arg5: memref<64x256xbf16, #tpu.memory_space<vmem>>, %arg6: memref<64x256xbf16, #tpu.memory_space<vmem>>, %arg7: memref<8x8xbf16, #tpu.memory_space<vmem>>, %arg8: memref<16x256xbf16, #tpu.memory_space<vmem>>) attributes {dimension_semantics = [#tpu.dimension_semantics<parallel>], iteration_bounds = array<i64: 1>, scalar_prefetch = 0 : i64, scratch_operands = 0 : i64, tpu.core_type = #tpu.core_type<tc>, window_params = [{transform_indices = @transform_0, window_bounds = array<i64: 16, 256>}, {pipeline_mode = #tpu.pipeline_mode<synchronous>, transform_indices = @transform_1, window_bounds = array<i64: 256, 512>}, {pipeline_mode = #tpu.pipeline_mode<synchronous>, transform_indices = @transform_2, window_bounds = array<i64: 256, 256>}, {pipeline_mode = #tpu.pipeline_mode<synchronous>, transform_indices = @transform_3, window_bounds = array<i64: 256, 256>}, {pipeline_mode = #tpu.pipeline_mode<synchronous>, transform_indices = @transform_4, window_bounds = array<i64: 64, 256>}, {pipeline_mode = #tpu.pipeline_mode<synchronous>, transform_indices = @transform_5, window_bounds = array<i64: 64, 256>}, {pipeline_mode = #tpu.pipeline_mode<synchronous>, transform_indices = @transform_6, window_bounds = array<i64: 8, 8>}, {transform_indices = @transform_7, window_bounds = array<i64: 16, 256>}]} {
    %c0 = arith.constant 0 : index
    %c0_0 = arith.constant 0 : index
    %0 = vector.load %arg1[%c0, %c0_0] : memref<16x256xbf16, #tpu.memory_space<vmem>>, vector<16x256xbf16>
    %c0_1 = arith.constant 0 : index
    %c0_2 = arith.constant 0 : index
    %1 = vector.load %arg2[%c0_1, %c0_2] : memref<256x512xbf16, #tpu.memory_space<vmem>>, vector<256x512xbf16>
    %cst = arith.constant dense<0.000000e+00> : vector<16x512xf32>
    %2 = tpu.matmul %0, %1, %cst {dimension_numbers = #tpu.dot_dimension_numbers<[1], [0], [0], [1], [0, 0, 1, 1], [], []>} : vector<16x256xbf16>, vector<256x512xbf16>, vector<16x512xf32> -> vector<16x512xf32>
    %3 = vector.extract_strided_slice %2 {offsets = [0, 0], sizes = [16, 256], strides = [1, 1]} : vector<16x512xf32> to vector<16x256xf32>
    %4 = vector.shape_cast %3 : vector<16x256xf32> to vector<2x8x256xf32>
    %5 = vector.extract_strided_slice %2 {offsets = [0, 256], sizes = [16, 256], strides = [1, 1]} : vector<16x512xf32> to vector<16x256xf32>
    %6 = vector.shape_cast %5 : vector<16x256xf32> to vector<2x8x256xf32>
    %cst_3 = arith.constant 0.000000e+00 : f32
    %7 = vector.broadcast %cst_3 : f32 to vector<2x8x256xf32>
    %cst_4 = arith.constant 0.000000e+00 : f32
    %8 = vector.broadcast %cst_4 : f32 to vector<2x8x256xf32>
    %c0_5 = arith.constant 0 : index
    %c0_6 = arith.constant 0 : index
    %9 = vector.load %arg5[%c0_5, %c0_6] : memref<64x256xbf16, #tpu.memory_space<vmem>>, vector<8x256xbf16>
    %c0_7 = arith.constant 0 : index
    %c0_8 = arith.constant 0 : index
    %10 = vector.load %arg6[%c0_7, %c0_8] : memref<64x256xbf16, #tpu.memory_space<vmem>>, vector<8x256xbf16>
    %11 = vector.extract_strided_slice %4 {offsets = [0, 0, 0], sizes = [2, 1, 256], strides = [1, 1, 1]} : vector<2x8x256xf32> to vector<2x1x256xf32>
    %12 = vector.shape_cast %11 : vector<2x1x256xf32> to vector<2x256xf32>
    %13 = vector.shape_cast %12 : vector<2x256xf32> to vector<2x1x256xf32>
    %14 = vector.extract_strided_slice %6 {offsets = [0, 0, 0], sizes = [2, 1, 256], strides = [1, 1, 1]} : vector<2x8x256xf32> to vector<2x1x256xf32>
    %15 = vector.shape_cast %14 : vector<2x1x256xf32> to vector<2x256xf32>
    %16 = vector.shape_cast %15 : vector<2x256xf32> to vector<2x1x256xf32>
    %17 = arith.extf %9 : vector<8x256xbf16> to vector<8x256xf32>
    %18 = vector.shape_cast %17 : vector<8x256xf32> to vector<1x8x256xf32>
    %19 = vector.broadcast %13 : vector<2x1x256xf32> to vector<2x8x256xf32>
    %20 = vector.broadcast %18 : vector<1x8x256xf32> to vector<2x8x256xf32>
    %21 = arith.mulf %19, %20 : vector<2x8x256xf32>
    %22 = arith.extf %10 : vector<8x256xbf16> to vector<8x256xf32>
    %23 = vector.shape_cast %22 : vector<8x256xf32> to vector<1x8x256xf32>
    %24 = vector.broadcast %16 : vector<2x1x256xf32> to vector<2x8x256xf32>
    %25 = vector.broadcast %23 : vector<1x8x256xf32> to vector<2x8x256xf32>
    %26 = arith.mulf %24, %25 : vector<2x8x256xf32>
    %27 = arith.subf %21, %26 : vector<2x8x256xf32>
    %28 = arith.addf %7, %27 : vector<2x8x256xf32>
    %29 = arith.extf %10 : vector<8x256xbf16> to vector<8x256xf32>
    %30 = vector.shape_cast %29 : vector<8x256xf32> to vector<1x8x256xf32>
    %31 = vector.broadcast %13 : vector<2x1x256xf32> to vector<2x8x256xf32>
    %32 = vector.broadcast %30 : vector<1x8x256xf32> to vector<2x8x256xf32>
    %33 = arith.mulf %31, %32 : vector<2x8x256xf32>
    %34 = arith.extf %9 : vector<8x256xbf16> to vector<8x256xf32>
    %35 = vector.shape_cast %34 : vector<8x256xf32> to vector<1x8x256xf32>
    %36 = vector.broadcast %16 : vector<2x1x256xf32> to vector<2x8x256xf32>
    %37 = vector.broadcast %35 : vector<1x8x256xf32> to vector<2x8x256xf32>
    %38 = arith.mulf %36, %37 : vector<2x8x256xf32>
    %39 = arith.addf %33, %38 : vector<2x8x256xf32>
    %40 = arith.addf %8, %39 : vector<2x8x256xf32>
    %c8 = arith.constant 8 : index
    %c0_9 = arith.constant 0 : index
    %41 = vector.load %arg5[%c8, %c0_9] : memref<64x256xbf16, #tpu.memory_space<vmem>>, vector<8x256xbf16>
    %c8_10 = arith.constant 8 : index
    %c0_11 = arith.constant 0 : index
    %42 = vector.load %arg6[%c8_10, %c0_11] : memref<64x256xbf16, #tpu.memory_space<vmem>>, vector<8x256xbf16>
    %43 = vector.extract_strided_slice %4 {offsets = [0, 1, 0], sizes = [2, 1, 256], strides = [1, 1, 1]} : vector<2x8x256xf32> to vector<2x1x256xf32>
    %44 = vector.shape_cast %43 : vector<2x1x256xf32> to vector<2x256xf32>
    %45 = vector.shape_cast %44 : vector<2x256xf32> to vector<2x1x256xf32>
    %46 = vector.extract_strided_slice %6 {offsets = [0, 1, 0], sizes = [2, 1, 256], strides = [1, 1, 1]} : vector<2x8x256xf32> to vector<2x1x256xf32>
    %47 = vector.shape_cast %46 : vector<2x1x256xf32> to vector<2x256xf32>
    %48 = vector.shape_cast %47 : vector<2x256xf32> to vector<2x1x256xf32>
    %49 = arith.extf %41 : vector<8x256xbf16> to vector<8x256xf32>
    %50 = vector.shape_cast %49 : vector<8x256xf32> to vector<1x8x256xf32>
    %51 = vector.broadcast %45 : vector<2x1x256xf32> to vector<2x8x256xf32>
    %52 = vector.broadcast %50 : vector<1x8x256xf32> to vector<2x8x256xf32>
    %53 = arith.mulf %51, %52 : vector<2x8x256xf32>
    %54 = arith.extf %42 : vector<8x256xbf16> to vector<8x256xf32>
    %55 = vector.shape_cast %54 : vector<8x256xf32> to vector<1x8x256xf32>
    %56 = vector.broadcast %48 : vector<2x1x256xf32> to vector<2x8x256xf32>
    %57 = vector.broadcast %55 : vector<1x8x256xf32> to vector<2x8x256xf32>
    %58 = arith.mulf %56, %57 : vector<2x8x256xf32>
    %59 = arith.subf %53, %58 : vector<2x8x256xf32>
    %60 = arith.addf %28, %59 : vector<2x8x256xf32>
    %61 = arith.extf %42 : vector<8x256xbf16> to vector<8x256xf32>
    %62 = vector.shape_cast %61 : vector<8x256xf32> to vector<1x8x256xf32>
    %63 = vector.broadcast %45 : vector<2x1x256xf32> to vector<2x8x256xf32>
    %64 = vector.broadcast %62 : vector<1x8x256xf32> to vector<2x8x256xf32>
    %65 = arith.mulf %63, %64 : vector<2x8x256xf32>
    %66 = arith.extf %41 : vector<8x256xbf16> to vector<8x256xf32>
    %67 = vector.shape_cast %66 : vector<8x256xf32> to vector<1x8x256xf32>
    %68 = vector.broadcast %48 : vector<2x1x256xf32> to vector<2x8x256xf32>
    %69 = vector.broadcast %67 : vector<1x8x256xf32> to vector<2x8x256xf32>
    %70 = arith.mulf %68, %69 : vector<2x8x256xf32>
    %71 = arith.addf %65, %70 : vector<2x8x256xf32>
    %72 = arith.addf %40, %71 : vector<2x8x256xf32>
    %c16 = arith.constant 16 : index
    %c0_12 = arith.constant 0 : index
    %73 = vector.load %arg5[%c16, %c0_12] : memref<64x256xbf16, #tpu.memory_space<vmem>>, vector<8x256xbf16>
    %c16_13 = arith.constant 16 : index
    %c0_14 = arith.constant 0 : index
    %74 = vector.load %arg6[%c16_13, %c0_14] : memref<64x256xbf16, #tpu.memory_space<vmem>>, vector<8x256xbf16>
    %75 = vector.extract_strided_slice %4 {offsets = [0, 2, 0], sizes = [2, 1, 256], strides = [1, 1, 1]} : vector<2x8x256xf32> to vector<2x1x256xf32>
    %76 = vector.shape_cast %75 : vector<2x1x256xf32> to vector<2x256xf32>
    %77 = vector.shape_cast %76 : vector<2x256xf32> to vector<2x1x256xf32>
    %78 = vector.extract_strided_slice %6 {offsets = [0, 2, 0], sizes = [2, 1, 256], strides = [1, 1, 1]} : vector<2x8x256xf32> to vector<2x1x256xf32>
    %79 = vector.shape_cast %78 : vector<2x1x256xf32> to vector<2x256xf32>
    %80 = vector.shape_cast %79 : vector<2x256xf32> to vector<2x1x256xf32>
    %81 = arith.extf %73 : vector<8x256xbf16> to vector<8x256xf32>
    %82 = vector.shape_cast %81 : vector<8x256xf32> to vector<1x8x256xf32>
    %83 = vector.broadcast %77 : vector<2x1x256xf32> to vector<2x8x256xf32>
    %84 = vector.broadcast %82 : vector<1x8x256xf32> to vector<2x8x256xf32>
    %85 = arith.mulf %83, %84 : vector<2x8x256xf32>
    %86 = arith.extf %74 : vector<8x256xbf16> to vector<8x256xf32>
    %87 = vector.shape_cast %86 : vector<8x256xf32> to vector<1x8x256xf32>
    %88 = vector.broadcast %80 : vector<2x1x256xf32> to vector<2x8x256xf32>
    %89 = vector.broadcast %87 : vector<1x8x256xf32> to vector<2x8x256xf32>
    %90 = arith.mulf %88, %89 : vector<2x8x256xf32>
    %91 = arith.subf %85, %90 : vector<2x8x256xf32>
    %92 = arith.addf %60, %91 : vector<2x8x256xf32>
    %93 = arith.extf %74 : vector<8x256xbf16> to vector<8x256xf32>
    %94 = vector.shape_cast %93 : vector<8x256xf32> to vector<1x8x256xf32>
    %95 = vector.broadcast %77 : vector<2x1x256xf32> to vector<2x8x256xf32>
    %96 = vector.broadcast %94 : vector<1x8x256xf32> to vector<2x8x256xf32>
    %97 = arith.mulf %95, %96 : vector<2x8x256xf32>
    %98 = arith.extf %73 : vector<8x256xbf16> to vector<8x256xf32>
    %99 = vector.shape_cast %98 : vector<8x256xf32> to vector<1x8x256xf32>
    %100 = vector.broadcast %80 : vector<2x1x256xf32> to vector<2x8x256xf32>
    %101 = vector.broadcast %99 : vector<1x8x256xf32> to vector<2x8x256xf32>
    %102 = arith.mulf %100, %101 : vector<2x8x256xf32>
    %103 = arith.addf %97, %102 : vector<2x8x256xf32>
    %104 = arith.addf %72, %103 : vector<2x8x256xf32>
    %c24 = arith.constant 24 : index
    %c0_15 = arith.constant 0 : index
    %105 = vector.load %arg5[%c24, %c0_15] : memref<64x256xbf16, #tpu.memory_space<vmem>>, vector<8x256xbf16>
    %c24_16 = arith.constant 24 : index
    %c0_17 = arith.constant 0 : index
    %106 = vector.load %arg6[%c24_16, %c0_17] : memref<64x256xbf16, #tpu.memory_space<vmem>>, vector<8x256xbf16>
    %107 = vector.extract_strided_slice %4 {offsets = [0, 3, 0], sizes = [2, 1, 256], strides = [1, 1, 1]} : vector<2x8x256xf32> to vector<2x1x256xf32>
    %108 = vector.shape_cast %107 : vector<2x1x256xf32> to vector<2x256xf32>
    %109 = vector.shape_cast %108 : vector<2x256xf32> to vector<2x1x256xf32>
    %110 = vector.extract_strided_slice %6 {offsets = [0, 3, 0], sizes = [2, 1, 256], strides = [1, 1, 1]} : vector<2x8x256xf32> to vector<2x1x256xf32>
    %111 = vector.shape_cast %110 : vector<2x1x256xf32> to vector<2x256xf32>
    %112 = vector.shape_cast %111 : vector<2x256xf32> to vector<2x1x256xf32>
    %113 = arith.extf %105 : vector<8x256xbf16> to vector<8x256xf32>
    %114 = vector.shape_cast %113 : vector<8x256xf32> to vector<1x8x256xf32>
    %115 = vector.broadcast %109 : vector<2x1x256xf32> to vector<2x8x256xf32>
    %116 = vector.broadcast %114 : vector<1x8x256xf32> to vector<2x8x256xf32>
    %117 = arith.mulf %115, %116 : vector<2x8x256xf32>
    %118 = arith.extf %106 : vector<8x256xbf16> to vector<8x256xf32>
    %119 = vector.shape_cast %118 : vector<8x256xf32> to vector<1x8x256xf32>
    %120 = vector.broadcast %112 : vector<2x1x256xf32> to vector<2x8x256xf32>
    %121 = vector.broadcast %119 : vector<1x8x256xf32> to vector<2x8x256xf32>
    %122 = arith.mulf %120, %121 : vector<2x8x256xf32>
    %123 = arith.subf %117, %122 : vector<2x8x256xf32>
    %124 = arith.addf %92, %123 : vector<2x8x256xf32>
    %125 = arith.extf %106 : vector<8x256xbf16> to vector<8x256xf32>
    %126 = vector.shape_cast %125 : vector<8x256xf32> to vector<1x8x256xf32>
    %127 = vector.broadcast %109 : vector<2x1x256xf32> to vector<2x8x256xf32>
    %128 = vector.broadcast %126 : vector<1x8x256xf32> to vector<2x8x256xf32>
    %129 = arith.mulf %127, %128 : vector<2x8x256xf32>
    %130 = arith.extf %105 : vector<8x256xbf16> to vector<8x256xf32>
    %131 = vector.shape_cast %130 : vector<8x256xf32> to vector<1x8x256xf32>
    %132 = vector.broadcast %112 : vector<2x1x256xf32> to vector<2x8x256xf32>
    %133 = vector.broadcast %131 : vector<1x8x256xf32> to vector<2x8x256xf32>
    %134 = arith.mulf %132, %133 : vector<2x8x256xf32>
    %135 = arith.addf %129, %134 : vector<2x8x256xf32>
    %136 = arith.addf %104, %135 : vector<2x8x256xf32>
    %c32 = arith.constant 32 : index
    %c0_18 = arith.constant 0 : index
    %137 = vector.load %arg5[%c32, %c0_18] : memref<64x256xbf16, #tpu.memory_space<vmem>>, vector<8x256xbf16>
    %c32_19 = arith.constant 32 : index
    %c0_20 = arith.constant 0 : index
    %138 = vector.load %arg6[%c32_19, %c0_20] : memref<64x256xbf16, #tpu.memory_space<vmem>>, vector<8x256xbf16>
    %139 = vector.extract_strided_slice %4 {offsets = [0, 4, 0], sizes = [2, 1, 256], strides = [1, 1, 1]} : vector<2x8x256xf32> to vector<2x1x256xf32>
    %140 = vector.shape_cast %139 : vector<2x1x256xf32> to vector<2x256xf32>
    %141 = vector.shape_cast %140 : vector<2x256xf32> to vector<2x1x256xf32>
    %142 = vector.extract_strided_slice %6 {offsets = [0, 4, 0], sizes = [2, 1, 256], strides = [1, 1, 1]} : vector<2x8x256xf32> to vector<2x1x256xf32>
    %143 = vector.shape_cast %142 : vector<2x1x256xf32> to vector<2x256xf32>
    %144 = vector.shape_cast %143 : vector<2x256xf32> to vector<2x1x256xf32>
    %145 = arith.extf %137 : vector<8x256xbf16> to vector<8x256xf32>
    %146 = vector.shape_cast %145 : vector<8x256xf32> to vector<1x8x256xf32>
    %147 = vector.broadcast %141 : vector<2x1x256xf32> to vector<2x8x256xf32>
    %148 = vector.broadcast %146 : vector<1x8x256xf32> to vector<2x8x256xf32>
    %149 = arith.mulf %147, %148 : vector<2x8x256xf32>
    %150 = arith.extf %138 : vector<8x256xbf16> to vector<8x256xf32>
    %151 = vector.shape_cast %150 : vector<8x256xf32> to vector<1x8x256xf32>
    %152 = vector.broadcast %144 : vector<2x1x256xf32> to vector<2x8x256xf32>
    %153 = vector.broadcast %151 : vector<1x8x256xf32> to vector<2x8x256xf32>
    %154 = arith.mulf %152, %153 : vector<2x8x256xf32>
    %155 = arith.subf %149, %154 : vector<2x8x256xf32>
    %156 = arith.addf %124, %155 : vector<2x8x256xf32>
    %157 = arith.extf %138 : vector<8x256xbf16> to vector<8x256xf32>
    %158 = vector.shape_cast %157 : vector<8x256xf32> to vector<1x8x256xf32>
    %159 = vector.broadcast %141 : vector<2x1x256xf32> to vector<2x8x256xf32>
    %160 = vector.broadcast %158 : vector<1x8x256xf32> to vector<2x8x256xf32>
    %161 = arith.mulf %159, %160 : vector<2x8x256xf32>
    %162 = arith.extf %137 : vector<8x256xbf16> to vector<8x256xf32>
    %163 = vector.shape_cast %162 : vector<8x256xf32> to vector<1x8x256xf32>
    %164 = vector.broadcast %144 : vector<2x1x256xf32> to vector<2x8x256xf32>
    %165 = vector.broadcast %163 : vector<1x8x256xf32> to vector<2x8x256xf32>
    %166 = arith.mulf %164, %165 : vector<2x8x256xf32>
    %167 = arith.addf %161, %166 : vector<2x8x256xf32>
    %168 = arith.addf %136, %167 : vector<2x8x256xf32>
    %c40 = arith.constant 40 : index
    %c0_21 = arith.constant 0 : index
    %169 = vector.load %arg5[%c40, %c0_21] : memref<64x256xbf16, #tpu.memory_space<vmem>>, vector<8x256xbf16>
    %c40_22 = arith.constant 40 : index
    %c0_23 = arith.constant 0 : index
    %170 = vector.load %arg6[%c40_22, %c0_23] : memref<64x256xbf16, #tpu.memory_space<vmem>>, vector<8x256xbf16>
    %171 = vector.extract_strided_slice %4 {offsets = [0, 5, 0], sizes = [2, 1, 256], strides = [1, 1, 1]} : vector<2x8x256xf32> to vector<2x1x256xf32>
    %172 = vector.shape_cast %171 : vector<2x1x256xf32> to vector<2x256xf32>
    %173 = vector.shape_cast %172 : vector<2x256xf32> to vector<2x1x256xf32>
    %174 = vector.extract_strided_slice %6 {offsets = [0, 5, 0], sizes = [2, 1, 256], strides = [1, 1, 1]} : vector<2x8x256xf32> to vector<2x1x256xf32>
    %175 = vector.shape_cast %174 : vector<2x1x256xf32> to vector<2x256xf32>
    %176 = vector.shape_cast %175 : vector<2x256xf32> to vector<2x1x256xf32>
    %177 = arith.extf %169 : vector<8x256xbf16> to vector<8x256xf32>
    %178 = vector.shape_cast %177 : vector<8x256xf32> to vector<1x8x256xf32>
    %179 = vector.broadcast %173 : vector<2x1x256xf32> to vector<2x8x256xf32>
    %180 = vector.broadcast %178 : vector<1x8x256xf32> to vector<2x8x256xf32>
    %181 = arith.mulf %179, %180 : vector<2x8x256xf32>
    %182 = arith.extf %170 : vector<8x256xbf16> to vector<8x256xf32>
    %183 = vector.shape_cast %182 : vector<8x256xf32> to vector<1x8x256xf32>
    %184 = vector.broadcast %176 : vector<2x1x256xf32> to vector<2x8x256xf32>
    %185 = vector.broadcast %183 : vector<1x8x256xf32> to vector<2x8x256xf32>
    %186 = arith.mulf %184, %185 : vector<2x8x256xf32>
    %187 = arith.subf %181, %186 : vector<2x8x256xf32>
    %188 = arith.addf %156, %187 : vector<2x8x256xf32>
    %189 = arith.extf %170 : vector<8x256xbf16> to vector<8x256xf32>
    %190 = vector.shape_cast %189 : vector<8x256xf32> to vector<1x8x256xf32>
    %191 = vector.broadcast %173 : vector<2x1x256xf32> to vector<2x8x256xf32>
    %192 = vector.broadcast %190 : vector<1x8x256xf32> to vector<2x8x256xf32>
    %193 = arith.mulf %191, %192 : vector<2x8x256xf32>
    %194 = arith.extf %169 : vector<8x256xbf16> to vector<8x256xf32>
    %195 = vector.shape_cast %194 : vector<8x256xf32> to vector<1x8x256xf32>
    %196 = vector.broadcast %176 : vector<2x1x256xf32> to vector<2x8x256xf32>
    %197 = vector.broadcast %195 : vector<1x8x256xf32> to vector<2x8x256xf32>
    %198 = arith.mulf %196, %197 : vector<2x8x256xf32>
    %199 = arith.addf %193, %198 : vector<2x8x256xf32>
    %200 = arith.addf %168, %199 : vector<2x8x256xf32>
    %c48 = arith.constant 48 : index
    %c0_24 = arith.constant 0 : index
    %201 = vector.load %arg5[%c48, %c0_24] : memref<64x256xbf16, #tpu.memory_space<vmem>>, vector<8x256xbf16>
    %c48_25 = arith.constant 48 : index
    %c0_26 = arith.constant 0 : index
    %202 = vector.load %arg6[%c48_25, %c0_26] : memref<64x256xbf16, #tpu.memory_space<vmem>>, vector<8x256xbf16>
    %203 = vector.extract_strided_slice %4 {offsets = [0, 6, 0], sizes = [2, 1, 256], strides = [1, 1, 1]} : vector<2x8x256xf32> to vector<2x1x256xf32>
    %204 = vector.shape_cast %203 : vector<2x1x256xf32> to vector<2x256xf32>
    %205 = vector.shape_cast %204 : vector<2x256xf32> to vector<2x1x256xf32>
    %206 = vector.extract_strided_slice %6 {offsets = [0, 6, 0], sizes = [2, 1, 256], strides = [1, 1, 1]} : vector<2x8x256xf32> to vector<2x1x256xf32>
    %207 = vector.shape_cast %206 : vector<2x1x256xf32> to vector<2x256xf32>
    %208 = vector.shape_cast %207 : vector<2x256xf32> to vector<2x1x256xf32>
    %209 = arith.extf %201 : vector<8x256xbf16> to vector<8x256xf32>
    %210 = vector.shape_cast %209 : vector<8x256xf32> to vector<1x8x256xf32>
    %211 = vector.broadcast %205 : vector<2x1x256xf32> to vector<2x8x256xf32>
    %212 = vector.broadcast %210 : vector<1x8x256xf32> to vector<2x8x256xf32>
    %213 = arith.mulf %211, %212 : vector<2x8x256xf32>
    %214 = arith.extf %202 : vector<8x256xbf16> to vector<8x256xf32>
    %215 = vector.shape_cast %214 : vector<8x256xf32> to vector<1x8x256xf32>
    %216 = vector.broadcast %208 : vector<2x1x256xf32> to vector<2x8x256xf32>
    %217 = vector.broadcast %215 : vector<1x8x256xf32> to vector<2x8x256xf32>
    %218 = arith.mulf %216, %217 : vector<2x8x256xf32>
    %219 = arith.subf %213, %218 : vector<2x8x256xf32>
    %220 = arith.addf %188, %219 : vector<2x8x256xf32>
    %221 = arith.extf %202 : vector<8x256xbf16> to vector<8x256xf32>
    %222 = vector.shape_cast %221 : vector<8x256xf32> to vector<1x8x256xf32>
    %223 = vector.broadcast %205 : vector<2x1x256xf32> to vector<2x8x256xf32>
    %224 = vector.broadcast %222 : vector<1x8x256xf32> to vector<2x8x256xf32>
    %225 = arith.mulf %223, %224 : vector<2x8x256xf32>
    %226 = arith.extf %201 : vector<8x256xbf16> to vector<8x256xf32>
    %227 = vector.shape_cast %226 : vector<8x256xf32> to vector<1x8x256xf32>
    %228 = vector.broadcast %208 : vector<2x1x256xf32> to vector<2x8x256xf32>
    %229 = vector.broadcast %227 : vector<1x8x256xf32> to vector<2x8x256xf32>
    %230 = arith.mulf %228, %229 : vector<2x8x256xf32>
    %231 = arith.addf %225, %230 : vector<2x8x256xf32>
    %232 = arith.addf %200, %231 : vector<2x8x256xf32>
    %c56 = arith.constant 56 : index
    %c0_27 = arith.constant 0 : index
    %233 = vector.load %arg5[%c56, %c0_27] : memref<64x256xbf16, #tpu.memory_space<vmem>>, vector<8x256xbf16>
    %c56_28 = arith.constant 56 : index
    %c0_29 = arith.constant 0 : index
    %234 = vector.load %arg6[%c56_28, %c0_29] : memref<64x256xbf16, #tpu.memory_space<vmem>>, vector<8x256xbf16>
    %235 = vector.extract_strided_slice %4 {offsets = [0, 7, 0], sizes = [2, 1, 256], strides = [1, 1, 1]} : vector<2x8x256xf32> to vector<2x1x256xf32>
    %236 = vector.shape_cast %235 : vector<2x1x256xf32> to vector<2x256xf32>
    %237 = vector.shape_cast %236 : vector<2x256xf32> to vector<2x1x256xf32>
    %238 = vector.extract_strided_slice %6 {offsets = [0, 7, 0], sizes = [2, 1, 256], strides = [1, 1, 1]} : vector<2x8x256xf32> to vector<2x1x256xf32>
    %239 = vector.shape_cast %238 : vector<2x1x256xf32> to vector<2x256xf32>
    %240 = vector.shape_cast %239 : vector<2x256xf32> to vector<2x1x256xf32>
    %241 = arith.extf %233 : vector<8x256xbf16> to vector<8x256xf32>
    %242 = vector.shape_cast %241 : vector<8x256xf32> to vector<1x8x256xf32>
    %243 = vector.broadcast %237 : vector<2x1x256xf32> to vector<2x8x256xf32>
    %244 = vector.broadcast %242 : vector<1x8x256xf32> to vector<2x8x256xf32>
    %245 = arith.mulf %243, %244 : vector<2x8x256xf32>
    %246 = arith.extf %234 : vector<8x256xbf16> to vector<8x256xf32>
    %247 = vector.shape_cast %246 : vector<8x256xf32> to vector<1x8x256xf32>
    %248 = vector.broadcast %240 : vector<2x1x256xf32> to vector<2x8x256xf32>
    %249 = vector.broadcast %247 : vector<1x8x256xf32> to vector<2x8x256xf32>
    %250 = arith.mulf %248, %249 : vector<2x8x256xf32>
    %251 = arith.subf %245, %250 : vector<2x8x256xf32>
    %252 = arith.addf %220, %251 : vector<2x8x256xf32>
    %253 = arith.extf %234 : vector<8x256xbf16> to vector<8x256xf32>
    %254 = vector.shape_cast %253 : vector<8x256xf32> to vector<1x8x256xf32>
    %255 = vector.broadcast %237 : vector<2x1x256xf32> to vector<2x8x256xf32>
    %256 = vector.broadcast %254 : vector<1x8x256xf32> to vector<2x8x256xf32>
    %257 = arith.mulf %255, %256 : vector<2x8x256xf32>
    %258 = arith.extf %233 : vector<8x256xbf16> to vector<8x256xf32>
    %259 = vector.shape_cast %258 : vector<8x256xf32> to vector<1x8x256xf32>
    %260 = vector.broadcast %240 : vector<2x1x256xf32> to vector<2x8x256xf32>
    %261 = vector.broadcast %259 : vector<1x8x256xf32> to vector<2x8x256xf32>
    %262 = arith.mulf %260, %261 : vector<2x8x256xf32>
    %263 = arith.addf %257, %262 : vector<2x8x256xf32>
    %264 = arith.addf %232, %263 : vector<2x8x256xf32>
    %265 = vector.shape_cast %252 : vector<2x8x256xf32> to vector<16x256xf32>
    %266 = arith.truncf %265 : vector<16x256xf32> to vector<16x256xbf16>
    %267 = vector.shape_cast %264 : vector<2x8x256xf32> to vector<16x256xf32>
    %268 = arith.truncf %267 : vector<16x256xf32> to vector<16x256xbf16>
    %c0_30 = arith.constant 0 : index
    %c0_31 = arith.constant 0 : index
    %269 = vector.load %arg3[%c0_30, %c0_31] : memref<256x256xbf16, #tpu.memory_space<vmem>>, vector<256x256xbf16>
    %cst_32 = arith.constant dense<0.000000e+00> : vector<16x256xf32>
    %270 = tpu.matmul %266, %269, %cst_32 {dimension_numbers = #tpu.dot_dimension_numbers<[1], [0], [0], [1], [0, 0, 1, 1], [], []>} : vector<16x256xbf16>, vector<256x256xbf16>, vector<16x256xf32> -> vector<16x256xf32>
    %c0_33 = arith.constant 0 : index
    %c0_34 = arith.constant 0 : index
    %271 = vector.load %arg4[%c0_33, %c0_34] : memref<256x256xbf16, #tpu.memory_space<vmem>>, vector<256x256xbf16>
    %cst_35 = arith.constant dense<0.000000e+00> : vector<16x256xf32>
    %272 = tpu.matmul %268, %271, %cst_35 {dimension_numbers = #tpu.dot_dimension_numbers<[1], [0], [0], [1], [0, 0, 1, 1], [], []>} : vector<16x256xbf16>, vector<256x256xbf16>, vector<16x256xf32> -> vector<16x256xf32>
    %273 = arith.addf %270, %272 : vector<16x256xf32>
    %274 = vector.shape_cast %0 : vector<16x256xbf16> to vector<2x8x256xbf16>
    %c0_36 = arith.constant 0 : index
    %c0_37 = arith.constant 0 : index
    %275 = vector.load %arg7[%c0_36, %c0_37] : memref<8x8xbf16, #tpu.memory_space<vmem>>, vector<8x8xbf16>
    %276 = vector.shape_cast %275 : vector<8x8xbf16> to vector<1x8x8xbf16>
    %277 = vector.broadcast %276 : vector<1x8x8xbf16> to vector<2x8x8xbf16>
    %cst_38 = arith.constant dense<0.000000e+00> : vector<2x8x256xf32>
    %278 = tpu.matmul %277, %274, %cst_38 {dimension_numbers = #tpu.dot_dimension_numbers<[2], [1], [1], [2], [0, 0, 0, 1, 1, 2], [0], [0]>} : vector<2x8x8xbf16>, vector<2x8x256xbf16>, vector<2x8x256xf32> -> vector<2x8x256xf32>
    %279 = vector.shape_cast %278 : vector<2x8x256xf32> to vector<16x256xf32>
    %280 = arith.addf %273, %279 : vector<16x256xf32>
    %cst_39 = arith.constant 5.000000e-01 : f32
    %281 = vector.broadcast %cst_39 : f32 to vector<16x256xf32>
    %282 = arith.mulf %281, %280 : vector<16x256xf32>
    %cst_40 = arith.constant 4.471500e-02 : f32
    %283 = vector.broadcast %cst_40 : f32 to vector<16x256xf32>
    %284 = arith.mulf %283, %280 : vector<16x256xf32>
    %285 = arith.mulf %284, %280 : vector<16x256xf32>
    %286 = arith.mulf %285, %280 : vector<16x256xf32>
    %287 = arith.addf %280, %286 : vector<16x256xf32>
    %cst_41 = arith.constant 0.797884583 : f32
    %288 = vector.broadcast %cst_41 : f32 to vector<16x256xf32>
    %289 = arith.mulf %288, %287 : vector<16x256xf32>
    %290 = math.tanh %289 : vector<16x256xf32>
    %cst_42 = arith.constant 1.000000e+00 : f32
    %291 = vector.broadcast %cst_42 : f32 to vector<16x256xf32>
    %292 = arith.addf %291, %290 : vector<16x256xf32>
    %293 = arith.mulf %282, %292 : vector<16x256xf32>
    %294 = arith.truncf %293 : vector<16x256xf32> to vector<16x256xbf16>
    %c0_43 = arith.constant 0 : index
    %c0_44 = arith.constant 0 : index
    %295 = vector.load %arg8[%c0_43, %c0_44] : memref<16x256xbf16, #tpu.memory_space<vmem>>, vector<16x256xbf16>
    tpu.vector_store %arg8[%c0_43, %c0_44], %294 {strides = array<i32>} : memref<16x256xbf16, #tpu.memory_space<vmem>>, vector<16x256xbf16>,
    return
  }
  func.func @transform_0(%arg0: i32) -> (i32, i32) {
    %c0_i32 = arith.constant 0 : i32
    %c0_i32_0 = arith.constant 0 : i32
    return %arg0, %c0_i32 : i32, i32
  }
  func.func @transform_1(%arg0: i32) -> (i32, i32) {
    %c0_i32 = arith.constant 0 : i32
    %c0_i32_0 = arith.constant 0 : i32
    %c0_i32_1 = arith.constant 0 : i32
    return %c0_i32, %c0_i32_0 : i32, i32
  }
  func.func @transform_2(%arg0: i32) -> (i32, i32) {
    %c0_i32 = arith.constant 0 : i32
    %c0_i32_0 = arith.constant 0 : i32
    %c0_i32_1 = arith.constant 0 : i32
    return %c0_i32, %c0_i32_0 : i32, i32
  }
  func.func @transform_3(%arg0: i32) -> (i32, i32) {
    %c0_i32 = arith.constant 0 : i32
    %c0_i32_0 = arith.constant 0 : i32
    %c0_i32_1 = arith.constant 0 : i32
    return %c0_i32, %c0_i32_0 : i32, i32
  }
  func.func @transform_4(%arg0: i32) -> (i32, i32) {
    %c0_i32 = arith.constant 0 : i32
    %c0_i32_0 = arith.constant 0 : i32
    %c0_i32_1 = arith.constant 0 : i32
    return %c0_i32, %c0_i32_0 : i32, i32
  }
  func.func @transform_5(%arg0: i32) -> (i32, i32) {
    %c0_i32 = arith.constant 0 : i32
    %c0_i32_0 = arith.constant 0 : i32
    %c0_i32_1 = arith.constant 0 : i32
    return %c0_i32, %c0_i32_0 : i32, i32
  }
  func.func @transform_6(%arg0: i32) -> (i32, i32) {
    %c0_i32 = arith.constant 0 : i32
    %c0_i32_0 = arith.constant 0 : i32
    %c0_i32_1 = arith.constant 0 : i32
    return %c0_i32, %c0_i32_0 : i32, i32
  }
  func.func @transform_7(%arg0: i32) -> (i32, i32) {
    %c0_i32 = arith.constant 0 : i32
    %c0_i32_0 = arith.constant 0 : i32
    return %arg0, %c0_i32 : i32, i32
  }
}

</mosaic_0001>

<llo_original>
// kernel: tpu_custom_call.1
$region0: #{tpu_custom_call.1}
  #allocation0 [shape = 'u32[]', space=smem, size = 0x4, offset = 0x4, fixed_abs, tag = 'smem constant byte address 0x4 - core index']
  #allocation1 [shape = 'u32[144,128]{1,0:T(1,128)}', space=vmem, size = 0x12000, scoped, tag = 'internal scratch']
  %s0 = inlined_call_operand.hbm [shape: bf16[16,256], index: 0, kind: input, shape index: {}]
  %s1 = inlined_call_operand.hbm [shape: bf16[256,512], index: 1, kind: input, shape index: {}]
  %s2 = inlined_call_operand.hbm [shape: bf16[256,256], index: 2, kind: input, shape index: {}]
  %s3 = inlined_call_operand.hbm [shape: bf16[256,256], index: 3, kind: input, shape index: {}]
  %s4 = inlined_call_operand.hbm [shape: bf16[64,256], index: 4, kind: input, shape index: {}]
  %s5 = inlined_call_operand.hbm [shape: bf16[64,256], index: 5, kind: input, shape index: {}]
  %s6 = inlined_call_operand.vmem [shape: bf16[8,8], index: 6, kind: input, shape index: {}]
  %s7 = inlined_call_operand.hbm [shape: bf16[16,256], index: 7, kind: output, shape index: {}]
  %s8 = sld [smem:[#allocation0]]
  $region62: #{tpu_custom_call.1} parent=0
    _
  %s10 = ssub.s32 1, %s8
  %s11 = scalar_select 0, %s10, %s8
  $region1: #{tpu_custom_call.1} parent=0
    #allocation2 [shape = 'u8[8192]{0}', space=vmem, size = 0x2000, scoped, tag = 'input window, operand 0, single buffered']
    #allocation3 [shape = 's32[1]{0}', space=sflag, size = 0x4, scoped, tag = 'scoped memory for tpu_custom_call.1']
    #allocation4 [shape = 's32[1]{0}', space=sflag, size = 0x4, scoped, tag = 'scoped memory for tpu_custom_call.1']
    #allocation5 [shape = 'u8[262144]{0}', space=vmem, size = 0x40000, scoped, tag = 'input window, operand 1, single buffered']
    #allocation6 [shape = 's32[1]{0}', space=sflag, size = 0x4, scoped, tag = 'scoped memory for tpu_custom_call.1']
    #allocation7 [shape = 'u8[131072]{0}', space=vmem, size = 0x20000, scoped, tag = 'input window, operand 2, single buffered']
    #allocation8 [shape = 'u8[131072]{0}', space=vmem, size = 0x20000, scoped, tag = 'input window, operand 3, single buffered']
    #allocation9 [shape = 's32[1]{0}', space=sflag, size = 0x4, scoped, tag = 'scoped memory for tpu_custom_call.1']
    #allocation10 [shape = 'u8[32768]{0}', space=vmem, size = 0x8000, scoped, tag = 'input window, operand 4, single buffered']
    #allocation11 [shape = 'u8[32768]{0}', space=vmem, size = 0x8000, scoped, tag = 'input window, operand 5, single buffered']
    #allocation12 [shape = 's32[1]{0}', space=sflag, size = 0x4, scoped, tag = 'scoped memory for tpu_custom_call.1']
    #allocation13 [shape = 'u8[8192]{0}', space=vmem, size = 0x2000, scoped, tag = 'output window, operand 0, single buffered']
    %12 = vsyncpa [#allocation3], 0
    %13 = vsyncpa [#allocation6], 0
    %14 = vsyncpa [#allocation9], 0
    %15 = vsyncpa [#allocation12], 0
    %16 = vsyncpa [#allocation4], 0
    // Predicated region
    $region2: #{tpu_custom_call.1} parent=1 // pred_check
      _
    $region3: #{tpu_custom_call.1} parent=1 // pred_check_branch
      %18 = sbr.rel (0) target = $region5
    $region4: #{tpu_custom_call.1} parent=1 // pred_region
      %s20 = ssub.s32 256, 256
      %21 = vsyncadd [#allocation3], %s20
      %s22 = sshll.u32 [#allocation2], 4
      %s23 = int_to_ptr.vmem [resolvable:$true] %s22
      %28 = dma.hbm_to_vmem [thread:$0]  %s0, 256, %s23, [#allocation3], 128, 128, 8
    $region5: #{tpu_custom_call.1} parent=1 // pred_fallthru
      _
    // Predicated region
    $region6: #{tpu_custom_call.1} parent=1 // pred_check
      _
    $region7: #{tpu_custom_call.1} parent=1 // pred_check_branch
      %30 = sbr.rel (0) target = $region9
    $region8: #{tpu_custom_call.1} parent=1 // pred_region
      %s32 = ssub.s32 8192, 8192
      %33 = vsyncadd [#allocation6], %s32
      %s34 = sshll.u32 [#allocation5], 4
      %s35 = int_to_ptr.vmem [resolvable:$true] %s34
      %40 = dma.hbm_to_vmem [thread:$0]  %s1, 8192, %s35, [#allocation6], 256, 256, 16
    $region9: #{tpu_custom_call.1} parent=1 // pred_fallthru
      _
    // Predicated region
    $region10: #{tpu_custom_call.1} parent=1 // pred_check
      _
    $region11: #{tpu_custom_call.1} parent=1 // pred_check_branch
      %42 = sbr.rel (0) target = $region13
    $region12: #{tpu_custom_call.1} parent=1 // pred_region
      %s44 = ssub.s32 4096, 4096
      %45 = vsyncadd [#allocation6], %s44
      %s46 = sshll.u32 [#allocation7], 4
      %s47 = int_to_ptr.vmem [resolvable:$true] %s46
      %52 = dma.hbm_to_vmem [thread:$0]  %s2, 4096, %s47, [#allocation6], 128, 128, 8
    $region13: #{tpu_custom_call.1} parent=1 // pred_fallthru
      _
    // Predicated region
    $region14: #{tpu_custom_call.1} parent=1 // pred_check
      _
    $region15: #{tpu_custom_call.1} parent=1 // pred_check_branch
      %54 = sbr.rel (0) target = $region17
    $region16: #{tpu_custom_call.1} parent=1 // pred_region
      %s56 = ssub.s32 4096, 4096
      %57 = vsyncadd [#allocation9], %s56
      %s58 = sshll.u32 [#allocation8], 4
      %s59 = int_to_ptr.vmem [resolvable:$true] %s58
      %64 = dma.hbm_to_vmem [thread:$0]  %s3, 4096, %s59, [#allocation9], 128, 128, 8
    $region17: #{tpu_custom_call.1} parent=1 // pred_fallthru
      _
    // Predicated region
    $region18: #{tpu_custom_call.1} parent=1 // pred_check
      _
    $region19: #{tpu_custom_call.1} parent=1 // pred_check_branch
      %66 = sbr.rel (0) target = $region21
    $region20: #{tpu_custom_call.1} parent=1 // pred_region
      %s68 = ssub.s32 1024, 1024
      %69 = vsyncadd [#allocation9], %s68
      %s70 = sshll.u32 [#allocation10], 4
      %s71 = int_to_ptr.vmem [resolvable:$true] %s70
      %76 = dma.hbm_to_vmem [thread:$0]  %s4, 1024, %s71, [#allocation9], 128, 128, 8
    $region21: #{tpu_custom_call.1} parent=1 // pred_fallthru
      _
    // Predicated region
    $region22: #{tpu_custom_call.1} parent=1 // pred_check
      _
    $region23: #{tpu_custom_call.1} parent=1 // pred_check_branch
      %78 = sbr.rel (0) target = $region25
    $region24: #{tpu_custom_call.1} parent=1 // pred_region
      %s80 = ssub.s32 1024, 1024
      %81 = vsyncadd [#allocation12], %s80
      %s82 = sshll.u32 [#allocation11], 4
      %s83 = int_to_ptr.vmem [resolvable:$true] %s82
      %88 = dma.hbm_to_vmem [thread:$0]  %s5, 1024, %s83, [#allocation12], 128, 128, 8
    $region25: #{tpu_custom_call.1} parent=1 // pred_fallthru
      _
    // Predicated region
    $region26: #{tpu_custom_call.1} parent=1 // pred_check
      _
    $region27: #{tpu_custom_call.1} parent=1 // pred_check_branch
      %90 = sbr.rel (0) target = $region29
    $region28: #{tpu_custom_call.1} parent=1 // pred_region
      _
    $region29: #{tpu_custom_call.1} parent=1 // pred_fallthru
      _
    // Predicated region
    $region30: #{tpu_custom_call.1} parent=1 // pred_check
      _
    $region31: #{tpu_custom_call.1} parent=1 // pred_check_branch
      %92 = sbr.rel (0) target = $region33
    $region32: #{tpu_custom_call.1} parent=1 // pred_region
      %93 = dma.done [#allocation3], 256
    $region33: #{tpu_custom_call.1} parent=1 // pred_fallthru
      _
    // Predicated region
    $region34: #{tpu_custom_call.1} parent=1 // pred_check
      _
    $region35: #{tpu_custom_call.1} parent=1 // pred_check_branch
      %95 = sbr.rel (0) target = $region37
    $region36: #{tpu_custom_call.1} parent=1 // pred_region
      %96 = dma.done [#allocation6], 8192
    $region37: #{tpu_custom_call.1} parent=1 // pred_fallthru
      _
    // Predicated region
    $region38: #{tpu_custom_call.1} parent=1 // pred_check
      _
    $region39: #{tpu_custom_call.1} parent=1 // pred_check_branch
      %98 = sbr.rel (0) target = $region41
    $region40: #{tpu_custom_call.1} parent=1 // pred_region
      %99 = dma.done [#allocation6], 4096
    $region41: #{tpu_custom_call.1} parent=1 // pred_fallthru
      _
    // Predicated region
    $region42: #{tpu_custom_call.1} parent=1 // pred_check
      _
    $region43: #{tpu_custom_call.1} parent=1 // pred_check_branch
      %101 = sbr.rel (0) target = $region45
    $region44: #{tpu_custom_call.1} parent=1 // pred_region
      %102 = dma.done [#allocation9], 4096
    $region45: #{tpu_custom_call.1} parent=1 // pred_fallthru
      _
    // Predicated region
    $region46: #{tpu_custom_call.1} parent=1 // pred_check
      _
    $region47: #{tpu_custom_call.1} parent=1 // pred_check_branch
      %104 = sbr.rel (0) target = $region49
    $region48: #{tpu_custom_call.1} parent=1 // pred_region
      %105 = dma.done [#allocation9], 1024
    $region49: #{tpu_custom_call.1} parent=1 // pred_fallthru
      _
    // Predicated region
    $region50: #{tpu_custom_call.1} parent=1 // pred_check
      _
    $region51: #{tpu_custom_call.1} parent=1 // pred_check_branch
      %107 = sbr.rel (0) target = $region53
    $region52: #{tpu_custom_call.1} parent=1 // pred_region
      %108 = dma.done [#allocation12], 1024
    $region53: #{tpu_custom_call.1} parent=1 // pred_fallthru
      _
    %v110 = vld [vmem:[#allocation2] sm:$0xff]
    %v111 = vld [vmem:[#allocation2 + $0x8] sm:$0xff]
    %v112 = vld [vmem:[#allocation5] sm:$0xff]
    %v113 = vld [vmem:[#allocation5 + $0x8] sm:$0xff]
    %v114 = vld [vmem:[#allocation5 + $0x10] sm:$0xff]
    %v115 = vld [vmem:[#allocation5 + $0x18] sm:$0xff]
    %v116 = vld [vmem:[#allocation5 + $0x20] sm:$0xff]
    %v117 = vld [vmem:[#allocation5 + $0x28] sm:$0xff]
    %v118 = vld [vmem:[#allocation5 + $0x30] sm:$0xff]
    %v119 = vld [vmem:[#allocation5 + $0x38] sm:$0xff]
    %v120 = vld [vmem:[#allocation5 + $0x40] sm:$0xff]
    %v121 = vld [vmem:[#allocation5 + $0x48] sm:$0xff]
    %v122 = vld [vmem:[#allocation5 + $0x50] sm:$0xff]
    %v123 = vld [vmem:[#allocation5 + $0x58] sm:$0xff]
    %v124 = vld [vmem:[#allocation5 + $0x60] sm:$0xff]
    %v125 = vld [vmem:[#allocation5 + $0x68] sm:$0xff]
    %v126 = vld [vmem:[#allocation5 + $0x70] sm:$0xff]
    %v127 = vld [vmem:[#allocation5 + $0x78] sm:$0xff]
    %v128 = vld [vmem:[#allocation5 + $0x80] sm:$0xff]
    %v129 = vld [vmem:[#allocation5 + $0x88] sm:$0xff]
    %v130 = vld [vmem:[#allocation5 + $0x90] sm:$0xff]
    %v131 = vld [vmem:[#allocation5 + $0x98] sm:$0xff]
    %v132 = vld [vmem:[#allocation5 + $0xa0] sm:$0xff]
    %v133 = vld [vmem:[#allocation5 + $0xa8] sm:$0xff]
    %v134 = vld [vmem:[#allocation5 + $0xb0] sm:$0xff]
    %v135 = vld [vmem:[#allocation5 + $0xb8] sm:$0xff]
    %v136 = vld [vmem:[#allocation5 + $0xc0] sm:$0xff]
    %v137 = vld [vmem:[#allocation5 + $0xc8] sm:$0xff]
    %v138 = vld [vmem:[#allocation5 + $0xd0] sm:$0xff]
    %v139 = vld [vmem:[#allocation5 + $0xd8] sm:$0xff]
    %v140 = vld [vmem:[#allocation5 + $0xe0] sm:$0xff]
    %v141 = vld [vmem:[#allocation5 + $0xe8] sm:$0xff]
    %v142 = vld [vmem:[#allocation5 + $0xf0] sm:$0xff]
    %v143 = vld [vmem:[#allocation5 + $0xf8] sm:$0xff]
    %v144 = vld [vmem:[#allocation5 + $0x100] sm:$0xff]
    %v145 = vld [vmem:[#allocation5 + $0x108] sm:$0xff]
    %v146 = vld [vmem:[#allocation5 + $0x110] sm:$0xff]
    %v147 = vld [vmem:[#allocation5 + $0x118] sm:$0xff]
    %v148 = vld [vmem:[#allocation5 + $0x120] sm:$0xff]
    %v149 = vld [vmem:[#allocation5 + $0x128] sm:$0xff]
    %v150 = vld [vmem:[#allocation5 + $0x130] sm:$0xff]
    %v151 = vld [vmem:[#allocation5 + $0x138] sm:$0xff]
    %v152 = vld [vmem:[#allocation5 + $0x140] sm:$0xff]
    %v153 = vld [vmem:[#allocation5 + $0x148] sm:$0xff]
    %v154 = vld [vmem:[#allocation5 + $0x150] sm:$0xff]
    %v155 = vld [vmem:[#allocation5 + $0x158] sm:$0xff]
    %v156 = vld [vmem:[#allocation5 + $0x160] sm:$0xff]
    %v157 = vld [vmem:[#allocation5 + $0x168] sm:$0xff]
    %v158 = vld [vmem:[#allocation5 + $0x170] sm:$0xff]
    %v159 = vld [vmem:[#allocation5 + $0x178] sm:$0xff]
    %v160 = vld [vmem:[#allocation5 + $0x180] sm:$0xff]
    %v161 = vld [vmem:[#allocation5 + $0x188] sm:$0xff]
    %v162 = vld [vmem:[#allocation5 + $0x190] sm:$0xff]
    %v163 = vld [vmem:[#allocation5 + $0x198] sm:$0xff]
    %v164 = vld [vmem:[#allocation5 + $0x1a0] sm:$0xff]
    %v165 = vld [vmem:[#allocation5 + $0x1a8] sm:$0xff]
    %v166 = vld [vmem:[#allocation5 + $0x1b0] sm:$0xff]
    %v167 = vld [vmem:[#allocation5 + $0x1b8] sm:$0xff]
    %v168 = vld [vmem:[#allocation5 + $0x1c0] sm:$0xff]
    %v169 = vld [vmem:[#allocation5 + $0x1c8] sm:$0xff]
    %v170 = vld [vmem:[#allocation5 + $0x1d0] sm:$0xff]
    %v171 = vld [vmem:[#allocation5 + $0x1d8] sm:$0xff]
    %v172 = vld [vmem:[#allocation5 + $0x1e0] sm:$0xff]
    %v173 = vld [vmem:[#allocation5 + $0x1e8] sm:$0xff]
    %v174 = vld [vmem:[#allocation5 + $0x1f0] sm:$0xff]
    %v175 = vld [vmem:[#allocation5 + $0x1f8] sm:$0xff]
    %v178 = vunpack.c.l.b16 %v110
    %v179 = vunpack.c.h.b16 %v110
    %v180 = vunpack.c.l.b16 %v111
    %v181 = vunpack.c.h.b16 %v111
    %v182 = vpack.c.b16 %v180, %v178
    %v183 = vpack.c.b16 %v181, %v179
    %v250 = vunpack.c.l.b16 %v112
    %v251 = vunpack.c.h.b16 %v112
    %v252 = vunpack.c.l.b16 %v113
    %v253 = vunpack.c.h.b16 %v113
    %v254 = vunpack.c.l.b16 %v114
    %v255 = vunpack.c.h.b16 %v114
    %v256 = vunpack.c.l.b16 %v115
    %v257 = vunpack.c.h.b16 %v115
    %v258 = vunpack.c.l.b16 %v116
    %v259 = vunpack.c.h.b16 %v116
    %v260 = vunpack.c.l.b16 %v117
    %v261 = vunpack.c.h.b16 %v117
    %v262 = vunpack.c.l.b16 %v118
    %v263 = vunpack.c.h.b16 %v118
    %v264 = vunpack.c.l.b16 %v119
    %v265 = vunpack.c.h.b16 %v119
    %v266 = vunpack.c.l.b16 %v120
    %v267 = vunpack.c.h.b16 %v120
    %v268 = vunpack.c.l.b16 %v121
    %v269 = vunpack.c.h.b16 %v121
    %v270 = vunpack.c.l.b16 %v122
    %v271 = vunpack.c.h.b16 %v122
    %v272 = vunpack.c.l.b16 %v123
    %v273 = vunpack.c.h.b16 %v123
    %v274 = vunpack.c.l.b16 %v124
    %v275 = vunpack.c.h.b16 %v124
    %v276 = vunpack.c.l.b16 %v125
    %v277 = vunpack.c.h.b16 %v125
    %v278 = vunpack.c.l.b16 %v126
    %v279 = vunpack.c.h.b16 %v126
    %v280 = vunpack.c.l.b16 %v127
    %v281 = vunpack.c.h.b16 %v127
    %v282 = vunpack.c.l.b16 %v128
    %v283 = vunpack.c.h.b16 %v128
    %v284 = vunpack.c.l.b16 %v129
    %v285 = vunpack.c.h.b16 %v129
    %v286 = vunpack.c.l.b16 %v130
    %v287 = vunpack.c.h.b16 %v130
    %v288 = vunpack.c.l.b16 %v131
    %v289 = vunpack.c.h.b16 %v131
    %v290 = vunpack.c.l.b16 %v132
    %v291 = vunpack.c.h.b16 %v132
    %v292 = vunpack.c.l.b16 %v133
    %v293 = vunpack.c.h.b16 %v133
    %v294 = vunpack.c.l.b16 %v134
    %v295 = vunpack.c.h.b16 %v134
    %v296 = vunpack.c.l.b16 %v135
    %v297 = vunpack.c.h.b16 %v135
    %v298 = vunpack.c.l.b16 %v136
    %v299 = vunpack.c.h.b16 %v136
    %v300 = vunpack.c.l.b16 %v137
    %v301 = vunpack.c.h.b16 %v137
    %v302 = vunpack.c.l.b16 %v138
    %v303 = vunpack.c.h.b16 %v138
    %v304 = vunpack.c.l.b16 %v139
    %v305 = vunpack.c.h.b16 %v139
    %v306 = vunpack.c.l.b16 %v140
    %v307 = vunpack.c.h.b16 %v140
    %v308 = vunpack.c.l.b16 %v141
    %v309 = vunpack.c.h.b16 %v141
    %v310 = vunpack.c.l.b16 %v142
    %v311 = vunpack.c.h.b16 %v142
    %v312 = vunpack.c.l.b16 %v143
    %v313 = vunpack.c.h.b16 %v143
    %v314 = vunpack.c.l.b16 %v144
    %v315 = vunpack.c.h.b16 %v144
    %v316 = vunpack.c.l.b16 %v145
    %v317 = vunpack.c.h.b16 %v145
    %v318 = vunpack.c.l.b16 %v146
    %v319 = vunpack.c.h.b16 %v146
    %v320 = vunpack.c.l.b16 %v147
    %v321 = vunpack.c.h.b16 %v147
    %v322 = vunpack.c.l.b16 %v148
    %v323 = vunpack.c.h.b16 %v148
    %v324 = vunpack.c.l.b16 %v149
    %v325 = vunpack.c.h.b16 %v149
    %v326 = vunpack.c.l.b16 %v150
    %v327 = vunpack.c.h.b16 %v150
    %v328 = vunpack.c.l.b16 %v151
    %v329 = vunpack.c.h.b16 %v151
    %v330 = vunpack.c.l.b16 %v152
    %v331 = vunpack.c.h.b16 %v152
    %v332 = vunpack.c.l.b16 %v153
    %v333 = vunpack.c.h.b16 %v153
    %v334 = vunpack.c.l.b16 %v154
    %v335 = vunpack.c.h.b16 %v154
    %v336 = vunpack.c.l.b16 %v155
    %v337 = vunpack.c.h.b16 %v155
    %v338 = vunpack.c.l.b16 %v156
    %v339 = vunpack.c.h.b16 %v156
    %v340 = vunpack.c.l.b16 %v157
    %v341 = vunpack.c.h.b16 %v157
    %v342 = vunpack.c.l.b16 %v158
    %v343 = vunpack.c.h.b16 %v158
    %v344 = vunpack.c.l.b16 %v159
    %v345 = vunpack.c.h.b16 %v159
    %v346 = vunpack.c.l.b16 %v160
    %v347 = vunpack.c.h.b16 %v160
    %v348 = vunpack.c.l.b16 %v161
    %v349 = vunpack.c.h.b16 %v161
    %v350 = vunpack.c.l.b16 %v162
    %v351 = vunpack.c.h.b16 %v162
    %v352 = vunpack.c.l.b16 %v163
    %v353 = vunpack.c.h.b16 %v163
    %v354 = vunpack.c.l.b16 %v164
    %v355 = vunpack.c.h.b16 %v164
    %v356 = vunpack.c.l.b16 %v165
    %v357 = vunpack.c.h.b16 %v165
    %v358 = vunpack.c.l.b16 %v166
    %v359 = vunpack.c.h.b16 %v166
    %v360 = vunpack.c.l.b16 %v167
    %v361 = vunpack.c.h.b16 %v167
    %v362 = vunpack.c.l.b16 %v168
    %v363 = vunpack.c.h.b16 %v168
    %v364 = vunpack.c.l.b16 %v169
    %v365 = vunpack.c.h.b16 %v169
    %v366 = vunpack.c.l.b16 %v170
    %v367 = vunpack.c.h.b16 %v170
    %v368 = vunpack.c.l.b16 %v171
    %v369 = vunpack.c.h.b16 %v171
    %v370 = vunpack.c.l.b16 %v172
    %v371 = vunpack.c.h.b16 %v172
    %v372 = vunpack.c.l.b16 %v173
    %v373 = vunpack.c.h.b16 %v173
    %v374 = vunpack.c.l.b16 %v174
    %v375 = vunpack.c.h.b16 %v174
    %v376 = vunpack.c.l.b16 %v175
    %v377 = vunpack.c.h.b16 %v175
    %v378 = vpack.c.b16 %v254, %v250
    %v379 = vpack.c.b16 %v255, %v251
    %v380 = vpack.c.b16 %v256, %v252
    %v381 = vpack.c.b16 %v257, %v253
    %v382 = vpack.c.b16 %v262, %v258
    %v383 = vpack.c.b16 %v263, %v259
    %v384 = vpack.c.b16 %v264, %v260
    %v385 = vpack.c.b16 %v265, %v261
    %v386 = vpack.c.b16 %v270, %v266
    %v387 = vpack.c.b16 %v271, %v267
    %v388 = vpack.c.b16 %v272, %v268
    %v389 = vpack.c.b16 %v273, %v269
    %v390 = vpack.c.b16 %v278, %v274
    %v391 = vpack.c.b16 %v279, %v275
    %v392 = vpack.c.b16 %v280, %v276
    %v393 = vpack.c.b16 %v281, %v277
    %v394 = vpack.c.b16 %v286, %v282
    %v395 = vpack.c.b16 %v287, %v283
    %v396 = vpack.c.b16 %v288, %v284
    %v397 = vpack.c.b16 %v289, %v285
    %v398 = vpack.c.b16 %v294, %v290
    %v399 = vpack.c.b16 %v295, %v291
    %v400 = vpack.c.b16 %v296, %v292
    %v401 = vpack.c.b16 %v297, %v293
    %v402 = vpack.c.b16 %v302, %v298
    %v403 = vpack.c.b16 %v303, %v299
    %v404 = vpack.c.b16 %v304, %v300
    %v405 = vpack.c.b16 %v305, %v301
    %v406 = vpack.c.b16 %v310, %v306
    %v407 = vpack.c.b16 %v311, %v307
    %v408 = vpack.c.b16 %v312, %v308
    %v409 = vpack.c.b16 %v313, %v309
    %v410 = vpack.c.b16 %v318, %v314
    %v411 = vpack.c.b16 %v319, %v315
    %v412 = vpack.c.b16 %v320, %v316
    %v413 = vpack.c.b16 %v321, %v317
    %v414 = vpack.c.b16 %v326, %v322
    %v415 = vpack.c.b16 %v327, %v323
    %v416 = vpack.c.b16 %v328, %v324
    %v417 = vpack.c.b16 %v329, %v325
    %v418 = vpack.c.b16 %v334, %v330
    %v419 = vpack.c.b16 %v335, %v331
    %v420 = vpack.c.b16 %v336, %v332
    %v421 = vpack.c.b16 %v337, %v333
    %v422 = vpack.c.b16 %v342, %v338
    %v423 = vpack.c.b16 %v343, %v339
    %v424 = vpack.c.b16 %v344, %v340
    %v425 = vpack.c.b16 %v345, %v341
    %v426 = vpack.c.b16 %v350, %v346
    %v427 = vpack.c.b16 %v351, %v347
    %v428 = vpack.c.b16 %v352, %v348
    %v429 = vpack.c.b16 %v353, %v349
    %v430 = vpack.c.b16 %v358, %v354
    %v431 = vpack.c.b16 %v359, %v355
    %v432 = vpack.c.b16 %v360, %v356
    %v433 = vpack.c.b16 %v361, %v357
    %v434 = vpack.c.b16 %v366, %v362
    %v435 = vpack.c.b16 %v367, %v363
    %v436 = vpack.c.b16 %v368, %v364
    %v437 = vpack.c.b16 %v369, %v365
    %v438 = vpack.c.b16 %v374, %v370
    %v439 = vpack.c.b16 %v375, %v371
    %v440 = vpack.c.b16 %v376, %v372
    %v441 = vpack.c.b16 %v377, %v373
    %506 = vmatprep.subr.bf16.mxu0 %v407
    %507 = vmatpush1.bf16.msra.mxu0 %v406
    %508 = vmatprep.subr.bf16.mxu0 %v403
    %509 = vmatpush1.bf16.msra.mxu0 %v402
    %510 = vmatprep.subr.bf16.mxu0 %v399
    %511 = vmatpush1.bf16.msra.mxu0 %v398
    %512 = vmatprep.subr.bf16.mxu0 %v395
    %513 = vmatpush1.bf16.msra.mxu0 %v394
    %514 = vmatprep.subr.bf16.mxu0 %v391
    %515 = vmatpush1.bf16.msra.mxu0 %v390
    %516 = vmatprep.subr.bf16.mxu0 %v387
    %517 = vmatpush1.bf16.msra.mxu0 %v386
    %518 = vmatprep.subr.bf16.mxu0 %v383
    %519 = vmatpush1.bf16.msra.mxu0 %v382
    %520 = vmatprep.subr.bf16.mxu0 %v379
    %521 = vmatpush1.bf16.msra.mxu0 %v378
    %522 = vmatprep.subr.bf16.mxu0 %v439
    %523 = vmatpush2.bf16.msra.mxu0 %v438
    %524 = vmatprep.subr.bf16.mxu0 %v435
    %525 = vmatpush2.bf16.msra.mxu0 %v434
    %526 = vmatprep.subr.bf16.mxu0 %v431
    %527 = vmatpush2.bf16.msra.mxu0 %v430
    %528 = vmatprep.subr.bf16.mxu0 %v427
    %529 = vmatpush2.bf16.msra.mxu0 %v426
    %530 = vmatprep.subr.bf16.mxu0 %v423
    %531 = vmatpush2.bf16.msra.mxu0 %v422
    %532 = vmatprep.subr.bf16.mxu0 %v419
    %533 = vmatpush2.bf16.msra.mxu0 %v418
    %534 = vmatprep.subr.bf16.mxu0 %v415
    %535 = vmatpush2.bf16.msra.mxu0 %v414
    %536 = vmatprep.subr.bf16.mxu0 %v411
    %537 = vmatpush2.bf16.msra.mxu0 %v410
    %538 = vmatprep.mubr.bf16.mxu0 %v183
    %539 = vmatmul.mubr.bf16.gmra.mxu0 %v182
    %v540 = vpop.f32.mrf.mxu0
    %v541 = vadd.f32 0.0, %v540
    %v542 = vpop.f32.mrf.mxu0
    %v543 = vadd.f32 0.0, %v542
    %v544 = vpop.f32.mrf.mxu0
    %v545 = vadd.f32 0.0, %v544
    %v546 = vpop.f32.mrf.mxu0
    %v547 = vadd.f32 0.0, %v546
    %548 = vdwg.mxu0
    %549 = vmatprep.subr.bf16.mxu0 %v409
    %550 = vmatpush1.bf16.msra.mxu0 %v408
    %551 = vmatprep.subr.bf16.mxu0 %v405
    %552 = vmatpush1.bf16.msra.mxu0 %v404
    %553 = vmatprep.subr.bf16.mxu0 %v401
    %554 = vmatpush1.bf16.msra.mxu0 %v400
    %555 = vmatprep.subr.bf16.mxu0 %v397
    %556 = vmatpush1.bf16.msra.mxu0 %v396
    %557 = vmatprep.subr.bf16.mxu0 %v393
    %558 = vmatpush1.bf16.msra.mxu0 %v392
    %559 = vmatprep.subr.bf16.mxu0 %v389
    %560 = vmatpush1.bf16.msra.mxu0 %v388
    %561 = vmatprep.subr.bf16.mxu0 %v385
    %562 = vmatpush1.bf16.msra.mxu0 %v384
    %563 = vmatprep.subr.bf16.mxu0 %v381
    %564 = vmatpush1.bf16.msra.mxu0 %v380
    %565 = vmatprep.subr.bf16.mxu0 %v441
    %566 = vmatpush2.bf16.msra.mxu0 %v440
    %567 = vmatprep.subr.bf16.mxu0 %v437
    %568 = vmatpush2.bf16.msra.mxu0 %v436
    %569 = vmatprep.subr.bf16.mxu0 %v433
    %570 = vmatpush2.bf16.msra.mxu0 %v432
    %571 = vmatprep.subr.bf16.mxu0 %v429
    %572 = vmatpush2.bf16.msra.mxu0 %v428
    %573 = vmatprep.subr.bf16.mxu0 %v425
    %574 = vmatpush2.bf16.msra.mxu0 %v424
    %575 = vmatprep.subr.bf16.mxu0 %v421
    %576 = vmatpush2.bf16.msra.mxu0 %v420
    %577 = vmatprep.subr.bf16.mxu0 %v417
    %578 = vmatpush2.bf16.msra.mxu0 %v416
    %579 = vmatprep.subr.bf16.mxu0 %v413
    %580 = vmatpush2.bf16.msra.mxu0 %v412
    %581 = vmatprep.mubr.bf16.mxu0 %v183
    %582 = vmatmul.mubr.bf16.gmra.mxu0 %v182
    %v583 = vpop.f32.mrf.mxu0
    %v584 = vadd.f32 0.0, %v583
    %v585 = vpop.f32.mrf.mxu0
    %v586 = vadd.f32 0.0, %v585
    %v587 = vpop.f32.mrf.mxu0
    %v588 = vadd.f32 0.0, %v587
    %v589 = vpop.f32.mrf.mxu0
    %v590 = vadd.f32 0.0, %v589
    %591 = vdwg.mxu0
    %v592 = vld [vmem:[#allocation10] sm:$0xff]
    %v593 = vld [vmem:[#allocation11] sm:$0xff]
    %v594 = vunpack.c.l.bf16 %v592
    %v595 = vunpack.c.h.bf16 %v592
    %v596 = vlaneseq
    %v597 = vshrl.u32 %v596, 7
    %v598 = vsub.s32 0, %v597
    %v599 = vrot.slane %v541, %v598
    %v600 = vlaneseq
    %v601 = vshrl.u32 %v600, 7
    %v602 = vsub.s32 0, %v601
    %v603 = vrot.slane %v543, %v602
    %v604 = vlaneseq
    %v605 = vshrl.u32 %v604, 7
    %v606 = vsub.s32 0, %v605
    %v607 = vrot.slane %v545, %v606
    %v608 = vlaneseq
    %v609 = vshrl.u32 %v608, 7
    %v610 = vsub.s32 0, %v609
    %v611 = vrot.slane %v547, %v610
    %v612 = vmul.f32 %v599, %v594
    %v613 = vmul.f32 %v603, %v595
    %v614 = vmul.f32 %v607, %v594
    %v615 = vmul.f32 %v611, %v595
    %v616 = vunpack.c.l.bf16 %v593
    %v617 = vunpack.c.h.bf16 %v593
    %v618 = vlaneseq
    %v619 = vshrl.u32 %v618, 7
    %v620 = vsub.s32 0, %v619
    %v621 = vrot.slane %v584, %v620
    %v622 = vlaneseq
    %v623 = vshrl.u32 %v622, 7
    %v624 = vsub.s32 0, %v623
    %v625 = vrot.slane %v586, %v624
    %v626 = vlaneseq
    %v627 = vshrl.u32 %v626, 7
    %v628 = vsub.s32 0, %v627
    %v629 = vrot.slane %v588, %v628
    %v630 = vlaneseq
    %v631 = vshrl.u32 %v630, 7
    %v632 = vsub.s32 0, %v631
    %v633 = vrot.slane %v590, %v632
    %v634 = vmul.f32 %v621, %v616
    %v635 = vmul.f32 %v625, %v617
    %v636 = vmul.f32 %v629, %v616
    %v637 = vmul.f32 %v633, %v617
    %v638 = vsub.f32 %v612, %v634
    %v639 = vsub.f32 %v613, %v635
    %v640 = vsub.f32 %v614, %v636
    %v641 = vsub.f32 %v615, %v637
    %v642 = vadd.f32 %v638, 0.0
    %v643 = vadd.f32 %v639, 0.0
    %v644 = vadd.f32 %v640, 0.0
    %v645 = vadd.f32 %v641, 0.0
    %v646 = vmul.f32 %v599, %v616
    %v647 = vmul.f32 %v603, %v617
    %v648 = vmul.f32 %v607, %v616
    %v649 = vmul.f32 %v611, %v617
    %v650 = vmul.f32 %v621, %v594
    %v651 = vmul.f32 %v625, %v595
    %v652 = vmul.f32 %v629, %v594
    %v653 = vmul.f32 %v633, %v595
    %v654 = vadd.f32 %v646, %v650
    %v655 = vadd.f32 %v647, %v651
    %v656 = vadd.f32 %v648, %v652
    %v657 = vadd.f32 %v649, %v653
    %v658 = vadd.f32 %v654, 0.0
    %v659 = vadd.f32 %v655, 0.0
    %v660 = vadd.f32 %v656, 0.0
    %v661 = vadd.f32 %v657, 0.0
    %v662 = vld [vmem:[#allocation10 + $0x8] sm:$0xff]
    %v663 = vld [vmem:[#allocation11 + $0x8] sm:$0xff]
    %v664 = vunpack.c.l.bf16 %v662
    %v665 = vunpack.c.h.bf16 %v662
    %v666 = vlaneseq
    %v667 = vshrl.u32 %v666, 7
    %v668 = vsub.s32 1, %v667
    %v669 = vrot.slane %v541, %v668
    %v670 = vlaneseq
    %v671 = vshrl.u32 %v670, 7
    %v672 = vsub.s32 1, %v671
    %v673 = vrot.slane %v543, %v672
    %v674 = vlaneseq
    %v675 = vshrl.u32 %v674, 7
    %v676 = vsub.s32 1, %v675
    %v677 = vrot.slane %v545, %v676
    %v678 = vlaneseq
    %v679 = vshrl.u32 %v678, 7
    %v680 = vsub.s32 1, %v679
    %v681 = vrot.slane %v547, %v680
    %v682 = vmul.f32 %v669, %v664
    %v683 = vmul.f32 %v673, %v665
    %v684 = vmul.f32 %v677, %v664
    %v685 = vmul.f32 %v681, %v665
    %v686 = vunpack.c.l.bf16 %v663
    %v687 = vunpack.c.h.bf16 %v663
    %v688 = vlaneseq
    %v689 = vshrl.u32 %v688, 7
    %v690 = vsub.s32 1, %v689
    %v691 = vrot.slane %v584, %v690
    %v692 = vlaneseq
    %v693 = vshrl.u32 %v692, 7
    %v694 = vsub.s32 1, %v693
    %v695 = vrot.slane %v586, %v694
    %v696 = vlaneseq
    %v697 = vshrl.u32 %v696, 7
    %v698 = vsub.s32 1, %v697
    %v699 = vrot.slane %v588, %v698
    %v700 = vlaneseq
    %v701 = vshrl.u32 %v700, 7
    %v702 = vsub.s32 1, %v701
    %v703 = vrot.slane %v590, %v702
    %v704 = vmul.f32 %v691, %v686
    %v705 = vmul.f32 %v695, %v687
    %v706 = vmul.f32 %v699, %v686
    %v707 = vmul.f32 %v703, %v687
    %v708 = vsub.f32 %v682, %v704
    %v709 = vsub.f32 %v683, %v705
    %v710 = vsub.f32 %v684, %v706
    %v711 = vsub.f32 %v685, %v707
    %v712 = vadd.f32 %v642, %v708
    %v713 = vadd.f32 %v643, %v709
    %v714 = vadd.f32 %v644, %v710
    %v715 = vadd.f32 %v645, %v711
    %v716 = vmul.f32 %v669, %v686
    %v717 = vmul.f32 %v673, %v687
    %v718 = vmul.f32 %v677, %v686
    %v719 = vmul.f32 %v681, %v687
    %v720 = vmul.f32 %v691, %v664
    %v721 = vmul.f32 %v695, %v665
    %v722 = vmul.f32 %v699, %v664
    %v723 = vmul.f32 %v703, %v665
    %v724 = vadd.f32 %v716, %v720
    %v725 = vadd.f32 %v717, %v721
    %v726 = vadd.f32 %v718, %v722
    %v727 = vadd.f32 %v719, %v723
    %v728 = vadd.f32 %v658, %v724
    %v729 = vadd.f32 %v659, %v725
    %v730 = vadd.f32 %v660, %v726
    %v731 = vadd.f32 %v661, %v727
    %v732 = vld [vmem:[#allocation10 + $0x10] sm:$0xff]
    %v733 = vld [vmem:[#allocation11 + $0x10] sm:$0xff]
    %v734 = vunpack.c.l.bf16 %v732
    %v735 = vunpack.c.h.bf16 %v732
    %v736 = vlaneseq
    %v737 = vshrl.u32 %v736, 7
    %v738 = vsub.s32 2, %v737
    %v739 = vrot.slane %v541, %v738
    %v740 = vlaneseq
    %v741 = vshrl.u32 %v740, 7
    %v742 = vsub.s32 2, %v741
    %v743 = vrot.slane %v543, %v742
    %v744 = vlaneseq
    %v745 = vshrl.u32 %v744, 7
    %v746 = vsub.s32 2, %v745
    %v747 = vrot.slane %v545, %v746
    %v748 = vlaneseq
    %v749 = vshrl.u32 %v748, 7
    %v750 = vsub.s32 2, %v749
    %v751 = vrot.slane %v547, %v750
    %v752 = vmul.f32 %v739, %v734
    %v753 = vmul.f32 %v743, %v735
    %v754 = vmul.f32 %v747, %v734
    %v755 = vmul.f32 %v751, %v735
    %v756 = vunpack.c.l.bf16 %v733
    %v757 = vunpack.c.h.bf16 %v733
    %v758 = vlaneseq
    %v759 = vshrl.u32 %v758, 7
    %v760 = vsub.s32 2, %v759
    %v761 = vrot.slane %v584, %v760
    %v762 = vlaneseq
    %v763 = vshrl.u32 %v762, 7
    %v764 = vsub.s32 2, %v763
    %v765 = vrot.slane %v586, %v764
    %v766 = vlaneseq
    %v767 = vshrl.u32 %v766, 7
    %v768 = vsub.s32 2, %v767
    %v769 = vrot.slane %v588, %v768
    %v770 = vlaneseq
    %v771 = vshrl.u32 %v770, 7
    %v772 = vsub.s32 2, %v771
    %v773 = vrot.slane %v590, %v772
    %v774 = vmul.f32 %v761, %v756
    %v775 = vmul.f32 %v765, %v757
    %v776 = vmul.f32 %v769, %v756
    %v777 = vmul.f32 %v773, %v757
    %v778 = vsub.f32 %v752, %v774
    %v779 = vsub.f32 %v753, %v775
    %v780 = vsub.f32 %v754, %v776
    %v781 = vsub.f32 %v755, %v777
    %v782 = vadd.f32 %v712, %v778
    %v783 = vadd.f32 %v713, %v779
    %v784 = vadd.f32 %v714, %v780
    %v785 = vadd.f32 %v715, %v781
    %v786 = vmul.f32 %v739, %v756
    %v787 = vmul.f32 %v743, %v757
    %v788 = vmul.f32 %v747, %v756
    %v789 = vmul.f32 %v751, %v757
    %v790 = vmul.f32 %v761, %v734
    %v791 = vmul.f32 %v765, %v735
    %v792 = vmul.f32 %v769, %v734
    %v793 = vmul.f32 %v773, %v735
    %v794 = vadd.f32 %v786, %v790
    %v795 = vadd.f32 %v787, %v791
    %v796 = vadd.f32 %v788, %v792
    %v797 = vadd.f32 %v789, %v793
    %v798 = vadd.f32 %v728, %v794
    %v799 = vadd.f32 %v729, %v795
    %v800 = vadd.f32 %v730, %v796
    %v801 = vadd.f32 %v731, %v797
    %v802 = vld [vmem:[#allocation10 + $0x18] sm:$0xff]
    %v803 = vld [vmem:[#allocation11 + $0x18] sm:$0xff]
    %v804 = vunpack.c.l.bf16 %v802
    %v805 = vunpack.c.h.bf16 %v802
    %v806 = vlaneseq
    %v807 = vshrl.u32 %v806, 7
    %v808 = vsub.s32 3, %v807
    %v809 = vrot.slane %v541, %v808
    %v810 = vlaneseq
    %v811 = vshrl.u32 %v810, 7
    %v812 = vsub.s32 3, %v811
    %v813 = vrot.slane %v543, %v812
    %v814 = vlaneseq
    %v815 = vshrl.u32 %v814, 7
    %v816 = vsub.s32 3, %v815
    %v817 = vrot.slane %v545, %v816
    %v818 = vlaneseq
    %v819 = vshrl.u32 %v818, 7
    %v820 = vsub.s32 3, %v819
    %v821 = vrot.slane %v547, %v820
    %v822 = vmul.f32 %v809, %v804
    %v823 = vmul.f32 %v813, %v805
    %v824 = vmul.f32 %v817, %v804
    %v825 = vmul.f32 %v821, %v805
    %v826 = vunpack.c.l.bf16 %v803
    %v827 = vunpack.c.h.bf16 %v803
    %v828 = vlaneseq
    %v829 = vshrl.u32 %v828, 7
    %v830 = vsub.s32 3, %v829
    %v831 = vrot.slane %v584, %v830
    %v832 = vlaneseq
    %v833 = vshrl.u32 %v832, 7
    %v834 = vsub.s32 3, %v833
    %v835 = vrot.slane %v586, %v834
    %v836 = vlaneseq
    %v837 = vshrl.u32 %v836, 7
    %v838 = vsub.s32 3, %v837
    %v839 = vrot.slane %v588, %v838
    %v840 = vlaneseq
    %v841 = vshrl.u32 %v840, 7
    %v842 = vsub.s32 3, %v841
    %v843 = vrot.slane %v590, %v842
    %v844 = vmul.f32 %v831, %v826
    %v845 = vmul.f32 %v835, %v827
    %v846 = vmul.f32 %v839, %v826
    %v847 = vmul.f32 %v843, %v827
    %v848 = vsub.f32 %v822, %v844
    %v849 = vsub.f32 %v823, %v845
    %v850 = vsub.f32 %v824, %v846
    %v851 = vsub.f32 %v825, %v847
    %v852 = vadd.f32 %v782, %v848
    %v853 = vadd.f32 %v783, %v849
    %v854 = vadd.f32 %v784, %v850
    %v855 = vadd.f32 %v785, %v851
    %v856 = vmul.f32 %v809, %v826
    %v857 = vmul.f32 %v813, %v827
    %v858 = vmul.f32 %v817, %v826
    %v859 = vmul.f32 %v821, %v827
    %v860 = vmul.f32 %v831, %v804
    %v861 = vmul.f32 %v835, %v805
    %v862 = vmul.f32 %v839, %v804
    %v863 = vmul.f32 %v843, %v805
    %v864 = vadd.f32 %v856, %v860
    %v865 = vadd.f32 %v857, %v861
    %v866 = vadd.f32 %v858, %v862
    %v867 = vadd.f32 %v859, %v863
    %v868 = vadd.f32 %v798, %v864
    %v869 = vadd.f32 %v799, %v865
    %v870 = vadd.f32 %v800, %v866
    %v871 = vadd.f32 %v801, %v867
    %v872 = vld [vmem:[#allocation10 + $0x20] sm:$0xff]
    %v873 = vld [vmem:[#allocation11 + $0x20] sm:$0xff]
    %v874 = vunpack.c.l.bf16 %v872
    %v875 = vunpack.c.h.bf16 %v872
    %v876 = vlaneseq
    %v877 = vshrl.u32 %v876, 7
    %v878 = vsub.s32 4, %v877
    %v879 = vrot.slane %v541, %v878
    %v880 = vlaneseq
    %v881 = vshrl.u32 %v880, 7
    %v882 = vsub.s32 4, %v881
    %v883 = vrot.slane %v543, %v882
    %v884 = vlaneseq
    %v885 = vshrl.u32 %v884, 7
    %v886 = vsub.s32 4, %v885
    %v887 = vrot.slane %v545, %v886
    %v888 = vlaneseq
    %v889 = vshrl.u32 %v888, 7
    %v890 = vsub.s32 4, %v889
    %v891 = vrot.slane %v547, %v890
    %v892 = vmul.f32 %v879, %v874
    %v893 = vmul.f32 %v883, %v875
    %v894 = vmul.f32 %v887, %v874
    %v895 = vmul.f32 %v891, %v875
    %v896 = vunpack.c.l.bf16 %v873
    %v897 = vunpack.c.h.bf16 %v873
    %v898 = vlaneseq
    %v899 = vshrl.u32 %v898, 7
    %v900 = vsub.s32 4, %v899
    %v901 = vrot.slane %v584, %v900
    %v902 = vlaneseq
    %v903 = vshrl.u32 %v902, 7
    %v904 = vsub.s32 4, %v903
    %v905 = vrot.slane %v586, %v904
    %v906 = vlaneseq
    %v907 = vshrl.u32 %v906, 7
    %v908 = vsub.s32 4, %v907
    %v909 = vrot.slane %v588, %v908
    %v910 = vlaneseq
    %v911 = vshrl.u32 %v910, 7
    %v912 = vsub.s32 4, %v911
    %v913 = vrot.slane %v590, %v912
    %v914 = vmul.f32 %v901, %v896
    %v915 = vmul.f32 %v905, %v897
    %v916 = vmul.f32 %v909, %v896
    %v917 = vmul.f32 %v913, %v897
    %v918 = vsub.f32 %v892, %v914
    %v919 = vsub.f32 %v893, %v915
    %v920 = vsub.f32 %v894, %v916
    %v921 = vsub.f32 %v895, %v917
    %v922 = vadd.f32 %v852, %v918
    %v923 = vadd.f32 %v853, %v919
    %v924 = vadd.f32 %v854, %v920
    %v925 = vadd.f32 %v855, %v921
    %v926 = vmul.f32 %v879, %v896
    %v927 = vmul.f32 %v883, %v897
    %v928 = vmul.f32 %v887, %v896
    %v929 = vmul.f32 %v891, %v897
    %v930 = vmul.f32 %v901, %v874
    %v931 = vmul.f32 %v905, %v875
    %v932 = vmul.f32 %v909, %v874
    %v933 = vmul.f32 %v913, %v875
    %v934 = vadd.f32 %v926, %v930
    %v935 = vadd.f32 %v927, %v931
    %v936 = vadd.f32 %v928, %v932
    %v937 = vadd.f32 %v929, %v933
    %v938 = vadd.f32 %v868, %v934
    %v939 = vadd.f32 %v869, %v935
    %v940 = vadd.f32 %v870, %v936
    %v941 = vadd.f32 %v871, %v937
    %v942 = vld [vmem:[#allocation10 + $0x28] sm:$0xff]
    %v943 = vld [vmem:[#allocation11 + $0x28] sm:$0xff]
    %v944 = vunpack.c.l.bf16 %v942
    %v945 = vunpack.c.h.bf16 %v942
    %v946 = vlaneseq
    %v947 = vshrl.u32 %v946, 7
    %v948 = vsub.s32 5, %v947
    %v949 = vrot.slane %v541, %v948
    %v950 = vlaneseq
    %v951 = vshrl.u32 %v950, 7
    %v952 = vsub.s32 5, %v951
    %v953 = vrot.slane %v543, %v952
    %v954 = vlaneseq
    %v955 = vshrl.u32 %v954, 7
    %v956 = vsub.s32 5, %v955
    %v957 = vrot.slane %v545, %v956
    %v958 = vlaneseq
    %v959 = vshrl.u32 %v958, 7
    %v960 = vsub.s32 5, %v959
    %v961 = vrot.slane %v547, %v960
    %v962 = vmul.f32 %v949, %v944
    %v963 = vmul.f32 %v953, %v945
    %v964 = vmul.f32 %v957, %v944
    %v965 = vmul.f32 %v961, %v945
    %v966 = vunpack.c.l.bf16 %v943
    %v967 = vunpack.c.h.bf16 %v943
    %v968 = vlaneseq
    %v969 = vshrl.u32 %v968, 7
    %v970 = vsub.s32 5, %v969
    %v971 = vrot.slane %v584, %v970
    %v972 = vlaneseq
    %v973 = vshrl.u32 %v972, 7
    %v974 = vsub.s32 5, %v973
    %v975 = vrot.slane %v586, %v974
    %v976 = vlaneseq
    %v977 = vshrl.u32 %v976, 7
    %v978 = vsub.s32 5, %v977
    %v979 = vrot.slane %v588, %v978
    %v980 = vlaneseq
    %v981 = vshrl.u32 %v980, 7
    %v982 = vsub.s32 5, %v981
    %v983 = vrot.slane %v590, %v982
    %v984 = vmul.f32 %v971, %v966
    %v985 = vmul.f32 %v975, %v967
    %v986 = vmul.f32 %v979, %v966
    %v987 = vmul.f32 %v983, %v967
    %v988 = vsub.f32 %v962, %v984
    %v989 = vsub.f32 %v963, %v985
    %v990 = vsub.f32 %v964, %v986
    %v991 = vsub.f32 %v965, %v987
    %v992 = vadd.f32 %v922, %v988
    %v993 = vadd.f32 %v923, %v989
    %v994 = vadd.f32 %v924, %v990
    %v995 = vadd.f32 %v925, %v991
    %v996 = vmul.f32 %v949, %v966
    %v997 = vmul.f32 %v953, %v967
    %v998 = vmul.f32 %v957, %v966
    %v999 = vmul.f32 %v961, %v967
    %v1000 = vmul.f32 %v971, %v944
    %v1001 = vmul.f32 %v975, %v945
    %v1002 = vmul.f32 %v979, %v944
    %v1003 = vmul.f32 %v983, %v945
    %v1004 = vadd.f32 %v996, %v1000
    %v1005 = vadd.f32 %v997, %v1001
    %v1006 = vadd.f32 %v998, %v1002
    %v1007 = vadd.f32 %v999, %v1003
    %v1008 = vadd.f32 %v938, %v1004
    %v1009 = vadd.f32 %v939, %v1005
    %v1010 = vadd.f32 %v940, %v1006
    %v1011 = vadd.f32 %v941, %v1007
    %v1012 = vld [vmem:[#allocation10 + $0x30] sm:$0xff]
    %v1013 = vld [vmem:[#allocation11 + $0x30] sm:$0xff]
    %v1014 = vunpack.c.l.bf16 %v1012
    %v1015 = vunpack.c.h.bf16 %v1012
    %v1016 = vlaneseq
    %v1017 = vshrl.u32 %v1016, 7
    %v1018 = vsub.s32 6, %v1017
    %v1019 = vrot.slane %v541, %v1018
    %v1020 = vlaneseq
    %v1021 = vshrl.u32 %v1020, 7
    %v1022 = vsub.s32 6, %v1021
    %v1023 = vrot.slane %v543, %v1022
    %v1024 = vlaneseq
    %v1025 = vshrl.u32 %v1024, 7
    %v1026 = vsub.s32 6, %v1025
    %v1027 = vrot.slane %v545, %v1026
    %v1028 = vlaneseq
    %v1029 = vshrl.u32 %v1028, 7
    %v1030 = vsub.s32 6, %v1029
    %v1031 = vrot.slane %v547, %v1030
    %v1032 = vmul.f32 %v1019, %v1014
    %v1033 = vmul.f32 %v1023, %v1015
    %v1034 = vmul.f32 %v1027, %v1014
    %v1035 = vmul.f32 %v1031, %v1015
    %v1036 = vunpack.c.l.bf16 %v1013
    %v1037 = vunpack.c.h.bf16 %v1013
    %v1038 = vlaneseq
    %v1039 = vshrl.u32 %v1038, 7
    %v1040 = vsub.s32 6, %v1039
    %v1041 = vrot.slane %v584, %v1040
    %v1042 = vlaneseq
    %v1043 = vshrl.u32 %v1042, 7
    %v1044 = vsub.s32 6, %v1043
    %v1045 = vrot.slane %v586, %v1044
    %v1046 = vlaneseq
    %v1047 = vshrl.u32 %v1046, 7
    %v1048 = vsub.s32 6, %v1047
    %v1049 = vrot.slane %v588, %v1048
    %v1050 = vlaneseq
    %v1051 = vshrl.u32 %v1050, 7
    %v1052 = vsub.s32 6, %v1051
    %v1053 = vrot.slane %v590, %v1052
    %v1054 = vmul.f32 %v1041, %v1036
    %v1055 = vmul.f32 %v1045, %v1037
    %v1056 = vmul.f32 %v1049, %v1036
    %v1057 = vmul.f32 %v1053, %v1037
    %v1058 = vsub.f32 %v1032, %v1054
    %v1059 = vsub.f32 %v1033, %v1055
    %v1060 = vsub.f32 %v1034, %v1056
    %v1061 = vsub.f32 %v1035, %v1057
    %v1062 = vadd.f32 %v992, %v1058
    %v1063 = vadd.f32 %v993, %v1059
    %v1064 = vadd.f32 %v994, %v1060
    %v1065 = vadd.f32 %v995, %v1061
    %v1066 = vmul.f32 %v1019, %v1036
    %v1067 = vmul.f32 %v1023, %v1037
    %v1068 = vmul.f32 %v1027, %v1036
    %v1069 = vmul.f32 %v1031, %v1037
    %v1070 = vmul.f32 %v1041, %v1014
    %v1071 = vmul.f32 %v1045, %v1015
    %v1072 = vmul.f32 %v1049, %v1014
    %v1073 = vmul.f32 %v1053, %v1015
    %v1074 = vadd.f32 %v1066, %v1070
    %v1075 = vadd.f32 %v1067, %v1071
    %v1076 = vadd.f32 %v1068, %v1072
    %v1077 = vadd.f32 %v1069, %v1073
    %v1078 = vadd.f32 %v1008, %v1074
    %v1079 = vadd.f32 %v1009, %v1075
    %v1080 = vadd.f32 %v1010, %v1076
    %v1081 = vadd.f32 %v1011, %v1077
    %v1082 = vld [vmem:[#allocation10 + $0x38] sm:$0xff]
    %v1083 = vld [vmem:[#allocation11 + $0x38] sm:$0xff]
    %v1084 = vunpack.c.l.bf16 %v1082
    %v1085 = vunpack.c.h.bf16 %v1082
    %v1086 = vlaneseq
    %v1087 = vshrl.u32 %v1086, 7
    %v1088 = vsub.s32 7, %v1087
    %v1089 = vrot.slane %v541, %v1088
    %v1090 = vlaneseq
    %v1091 = vshrl.u32 %v1090, 7
    %v1092 = vsub.s32 7, %v1091
    %v1093 = vrot.slane %v543, %v1092
    %v1094 = vlaneseq
    %v1095 = vshrl.u32 %v1094, 7
    %v1096 = vsub.s32 7, %v1095
    %v1097 = vrot.slane %v545, %v1096
    %v1098 = vlaneseq
    %v1099 = vshrl.u32 %v1098, 7
    %v1100 = vsub.s32 7, %v1099
    %v1101 = vrot.slane %v547, %v1100
    %v1102 = vmul.f32 %v1089, %v1084
    %v1103 = vmul.f32 %v1093, %v1085
    %v1104 = vmul.f32 %v1097, %v1084
    %v1105 = vmul.f32 %v1101, %v1085
    %v1106 = vunpack.c.l.bf16 %v1083
    %v1107 = vunpack.c.h.bf16 %v1083
    %v1108 = vlaneseq
    %v1109 = vshrl.u32 %v1108, 7
    %v1110 = vsub.s32 7, %v1109
    %v1111 = vrot.slane %v584, %v1110
    %v1112 = vlaneseq
    %v1113 = vshrl.u32 %v1112, 7
    %v1114 = vsub.s32 7, %v1113
    %v1115 = vrot.slane %v586, %v1114
    %v1116 = vlaneseq
    %v1117 = vshrl.u32 %v1116, 7
    %v1118 = vsub.s32 7, %v1117
    %v1119 = vrot.slane %v588, %v1118
    %v1120 = vlaneseq
    %v1121 = vshrl.u32 %v1120, 7
    %v1122 = vsub.s32 7, %v1121
    %v1123 = vrot.slane %v590, %v1122
    %v1124 = vmul.f32 %v1111, %v1106
    %v1125 = vmul.f32 %v1115, %v1107
    %v1126 = vmul.f32 %v1119, %v1106
    %v1127 = vmul.f32 %v1123, %v1107
    %v1128 = vsub.f32 %v1102, %v1124
    %v1129 = vsub.f32 %v1103, %v1125
    %v1130 = vsub.f32 %v1104, %v1126
    %v1131 = vsub.f32 %v1105, %v1127
    %v1132 = vadd.f32 %v1062, %v1128
    %v1133 = vadd.f32 %v1063, %v1129
    %v1134 = vadd.f32 %v1064, %v1130
    %v1135 = vadd.f32 %v1065, %v1131
    %v1136 = vmul.f32 %v1089, %v1106
    %v1137 = vmul.f32 %v1093, %v1107
    %v1138 = vmul.f32 %v1097, %v1106
    %v1139 = vmul.f32 %v1101, %v1107
    %v1140 = vmul.f32 %v1111, %v1084
    %v1141 = vmul.f32 %v1115, %v1085
    %v1142 = vmul.f32 %v1119, %v1084
    %v1143 = vmul.f32 %v1123, %v1085
    %v1144 = vadd.f32 %v1136, %v1140
    %v1145 = vadd.f32 %v1137, %v1141
    %v1146 = vadd.f32 %v1138, %v1142
    %v1147 = vadd.f32 %v1139, %v1143
    %v1148 = vadd.f32 %v1078, %v1144
    %v1149 = vadd.f32 %v1079, %v1145
    %v1150 = vadd.f32 %v1080, %v1146
    %v1151 = vadd.f32 %v1081, %v1147
    %v1152 = vpack.c.bf16 %v1134, %v1132
    %v1153 = vpack.c.bf16 %v1135, %v1133
    %v1154 = vpack.c.bf16 %v1150, %v1148
    %v1155 = vpack.c.bf16 %v1151, %v1149
    %v1156 = vld [vmem:[#allocation7] sm:$0xff]
    %v1157 = vld [vmem:[#allocation7 + $0x8] sm:$0xff]
    %v1158 = vld [vmem:[#allocation7 + $0x10] sm:$0xff]
    %v1159 = vld [vmem:[#allocation7 + $0x18] sm:$0xff]
    %v1160 = vld [vmem:[#allocation7 + $0x20] sm:$0xff]
    %v1161 = vld [vmem:[#allocation7 + $0x28] sm:$0xff]
    %v1162 = vld [vmem:[#allocation7 + $0x30] sm:$0xff]
    %v1163 = vld [vmem:[#allocation7 + $0x38] sm:$0xff]
    %v1164 = vld [vmem:[#allocation7 + $0x40] sm:$0xff]
    %v1165 = vld [vmem:[#allocation7 + $0x48] sm:$0xff]
    %v1166 = vld [vmem:[#allocation7 + $0x50] sm:$0xff]
    %v1167 = vld [vmem:[#allocation7 + $0x58] sm:$0xff]
    %v1168 = vld [vmem:[#allocation7 + $0x60] sm:$0xff]
    %v1169 = vld [vmem:[#allocation7 + $0x68] sm:$0xff]
    %v1170 = vld [vmem:[#allocation7 + $0x70] sm:$0xff]
    %v1171 = vld [vmem:[#allocation7 + $0x78] sm:$0xff]
    %v1172 = vld [vmem:[#allocation7 + $0x80] sm:$0xff]
    %v1173 = vld [vmem:[#allocation7 + $0x88] sm:$0xff]
    %v1174 = vld [vmem:[#allocation7 + $0x90] sm:$0xff]
    %v1175 = vld [vmem:[#allocation7 + $0x98] sm:$0xff]
    %v1176 = vld [vmem:[#allocation7 + $0xa0] sm:$0xff]
    %v1177 = vld [vmem:[#allocation7 + $0xa8] sm:$0xff]
    %v1178 = vld [vmem:[#allocation7 + $0xb0] sm:$0xff]
    %v1179 = vld [vmem:[#allocation7 + $0xb8] sm:$0xff]
    %v1180 = vld [vmem:[#allocation7 + $0xc0] sm:$0xff]
    %v1181 = vld [vmem:[#allocation7 + $0xc8] sm:$0xff]
    %v1182 = vld [vmem:[#allocation7 + $0xd0] sm:$0xff]
    %v1183 = vld [vmem:[#allocation7 + $0xd8] sm:$0xff]
    %v1184 = vld [vmem:[#allocation7 + $0xe0] sm:$0xff]
    %v1185 = vld [vmem:[#allocation7 + $0xe8] sm:$0xff]
    %v1186 = vld [vmem:[#allocation7 + $0xf0] sm:$0xff]
    %v1187 = vld [vmem:[#allocation7 + $0xf8] sm:$0xff]
    %v1188 = vld [vmem:[#allocation8] sm:$0xff]
    %v1189 = vld [vmem:[#allocation8 + $0x8] sm:$0xff]
    %v1190 = vld [vmem:[#allocation8 + $0x10] sm:$0xff]
    %v1191 = vld [vmem:[#allocation8 + $0x18] sm:$0xff]
    %v1192 = vld [vmem:[#allocation8 + $0x20] sm:$0xff]
    %v1193 = vld [vmem:[#allocation8 + $0x28] sm:$0xff]
    %v1194 = vld [vmem:[#allocation8 + $0x30] sm:$0xff]
    %v1195 = vld [vmem:[#allocation8 + $0x38] sm:$0xff]
    %v1196 = vld [vmem:[#allocation8 + $0x40] sm:$0xff]
    %v1197 = vld [vmem:[#allocation8 + $0x48] sm:$0xff]
    %v1198 = vld [vmem:[#allocation8 + $0x50] sm:$0xff]
    %v1199 = vld [vmem:[#allocation8 + $0x58] sm:$0xff]
    %v1200 = vld [vmem:[#allocation8 + $0x60] sm:$0xff]
    %v1201 = vld [vmem:[#allocation8 + $0x68] sm:$0xff]
    %v1202 = vld [vmem:[#allocation8 + $0x70] sm:$0xff]
    %v1203 = vld [vmem:[#allocation8 + $0x78] sm:$0xff]
    %v1204 = vld [vmem:[#allocation8 + $0x80] sm:$0xff]
    %v1205 = vld [vmem:[#allocation8 + $0x88] sm:$0xff]
    %v1206 = vld [vmem:[#allocation8 + $0x90] sm:$0xff]
    %v1207 = vld [vmem:[#allocation8 + $0x98] sm:$0xff]
    %v1208 = vld [vmem:[#allocation8 + $0xa0] sm:$0xff]
    %v1209 = vld [vmem:[#allocation8 + $0xa8] sm:$0xff]
    %v1210 = vld [vmem:[#allocation8 + $0xb0] sm:$0xff]
    %v1211 = vld [vmem:[#allocation8 + $0xb8] sm:$0xff]
    %v1212 = vld [vmem:[#allocation8 + $0xc0] sm:$0xff]
    %v1213 = vld [vmem:[#allocation8 + $0xc8] sm:$0xff]
    %v1214 = vld [vmem:[#allocation8 + $0xd0] sm:$0xff]
    %v1215 = vld [vmem:[#allocation8 + $0xd8] sm:$0xff]
    %v1216 = vld [vmem:[#allocation8 + $0xe0] sm:$0xff]
    %v1217 = vld [vmem:[#allocation8 + $0xe8] sm:$0xff]
    %v1218 = vld [vmem:[#allocation8 + $0xf0] sm:$0xff]
    %v1219 = vld [vmem:[#allocation8 + $0xf8] sm:$0xff]
    %v1252 = vunpack.c.l.b16 %v1188
    %v1253 = vunpack.c.h.b16 %v1188
    %v1254 = vunpack.c.l.b16 %v1189
    %v1255 = vunpack.c.h.b16 %v1189
    %v1256 = vunpack.c.l.b16 %v1190
    %v1257 = vunpack.c.h.b16 %v1190
    %v1258 = vunpack.c.l.b16 %v1191
    %v1259 = vunpack.c.h.b16 %v1191
    %v1260 = vunpack.c.l.b16 %v1192
    %v1261 = vunpack.c.h.b16 %v1192
    %v1262 = vunpack.c.l.b16 %v1193
    %v1263 = vunpack.c.h.b16 %v1193
    %v1264 = vunpack.c.l.b16 %v1194
    %v1265 = vunpack.c.h.b16 %v1194
    %v1266 = vunpack.c.l.b16 %v1195
    %v1267 = vunpack.c.h.b16 %v1195
    %v1268 = vunpack.c.l.b16 %v1196
    %v1269 = vunpack.c.h.b16 %v1196
    %v1270 = vunpack.c.l.b16 %v1197
    %v1271 = vunpack.c.h.b16 %v1197
    %v1272 = vunpack.c.l.b16 %v1198
    %v1273 = vunpack.c.h.b16 %v1198
    %v1274 = vunpack.c.l.b16 %v1199
    %v1275 = vunpack.c.h.b16 %v1199
    %v1276 = vunpack.c.l.b16 %v1200
    %v1277 = vunpack.c.h.b16 %v1200
    %v1278 = vunpack.c.l.b16 %v1201
    %v1279 = vunpack.c.h.b16 %v1201
    %v1280 = vunpack.c.l.b16 %v1202
    %v1281 = vunpack.c.h.b16 %v1202
    %v1282 = vunpack.c.l.b16 %v1203
    %v1283 = vunpack.c.h.b16 %v1203
    %v1284 = vunpack.c.l.b16 %v1204
    %v1285 = vunpack.c.h.b16 %v1204
    %v1286 = vunpack.c.l.b16 %v1205
    %v1287 = vunpack.c.h.b16 %v1205
    %v1288 = vunpack.c.l.b16 %v1206
    %v1289 = vunpack.c.h.b16 %v1206
    %v1290 = vunpack.c.l.b16 %v1207
    %v1291 = vunpack.c.h.b16 %v1207
    %v1292 = vunpack.c.l.b16 %v1208
    %v1293 = vunpack.c.h.b16 %v1208
    %v1294 = vunpack.c.l.b16 %v1209
    %v1295 = vunpack.c.h.b16 %v1209
    %v1296 = vunpack.c.l.b16 %v1210
    %v1297 = vunpack.c.h.b16 %v1210
    %v1298 = vunpack.c.l.b16 %v1211
    %v1299 = vunpack.c.h.b16 %v1211
    %v1300 = vunpack.c.l.b16 %v1212
    %v1301 = vunpack.c.h.b16 %v1212
    %v1302 = vunpack.c.l.b16 %v1213
    %v1303 = vunpack.c.h.b16 %v1213
    %v1304 = vunpack.c.l.b16 %v1214
    %v1305 = vunpack.c.h.b16 %v1214
    %v1306 = vunpack.c.l.b16 %v1215
    %v1307 = vunpack.c.h.b16 %v1215
    %v1308 = vunpack.c.l.b16 %v1216
    %v1309 = vunpack.c.h.b16 %v1216
    %v1310 = vunpack.c.l.b16 %v1217
    %v1311 = vunpack.c.h.b16 %v1217
    %v1312 = vunpack.c.l.b16 %v1218
    %v1313 = vunpack.c.h.b16 %v1218
    %v1314 = vunpack.c.l.b16 %v1219
    %v1315 = vunpack.c.h.b16 %v1219
    %v1316 = vpack.c.b16 %v1254, %v1252
    %v1317 = vpack.c.b16 %v1255, %v1253
    %v1318 = vpack.c.b16 %v1258, %v1256
    %v1319 = vpack.c.b16 %v1259, %v1257
    %v1320 = vpack.c.b16 %v1262, %v1260
    %v1321 = vpack.c.b16 %v1263, %v1261
    %v1322 = vpack.c.b16 %v1266, %v1264
    %v1323 = vpack.c.b16 %v1267, %v1265
    %v1324 = vpack.c.b16 %v1270, %v1268
    %v1325 = vpack.c.b16 %v1271, %v1269
    %v1326 = vpack.c.b16 %v1274, %v1272
    %v1327 = vpack.c.b16 %v1275, %v1273
    %v1328 = vpack.c.b16 %v1278, %v1276
    %v1329 = vpack.c.b16 %v1279, %v1277
    %v1330 = vpack.c.b16 %v1282, %v1280
    %v1331 = vpack.c.b16 %v1283, %v1281
    %v1332 = vpack.c.b16 %v1286, %v1284
    %v1333 = vpack.c.b16 %v1287, %v1285
    %v1334 = vpack.c.b16 %v1290, %v1288
    %v1335 = vpack.c.b16 %v1291, %v1289
    %v1336 = vpack.c.b16 %v1294, %v1292
    %v1337 = vpack.c.b16 %v1295, %v1293
    %v1338 = vpack.c.b16 %v1298, %v1296
    %v1339 = vpack.c.b16 %v1299, %v1297
    %v1340 = vpack.c.b16 %v1302, %v1300
    %v1341 = vpack.c.b16 %v1303, %v1301
    %v1342 = vpack.c.b16 %v1306, %v1304
    %v1343 = vpack.c.b16 %v1307, %v1305
    %v1344 = vpack.c.b16 %v1310, %v1308
    %v1345 = vpack.c.b16 %v1311, %v1309
    %v1346 = vpack.c.b16 %v1314, %v1312
    %v1347 = vpack.c.b16 %v1315, %v1313
    %1380 = vmatprep.subr.bf16.mxu0 %v1331
    %1381 = vmatpush1.bf16.msra.mxu0 %v1330
    %1382 = vmatprep.subr.bf16.mxu0 %v1329
    %1383 = vmatpush1.bf16.msra.mxu0 %v1328
    %1384 = vmatprep.subr.bf16.mxu0 %v1327
    %1385 = vmatpush1.bf16.msra.mxu0 %v1326
    %1386 = vmatprep.subr.bf16.mxu0 %v1325
    %1387 = vmatpush1.bf16.msra.mxu0 %v1324
    %1388 = vmatprep.subr.bf16.mxu0 %v1323
    %1389 = vmatpush1.bf16.msra.mxu0 %v1322
    %1390 = vmatprep.subr.bf16.mxu0 %v1321
    %1391 = vmatpush1.bf16.msra.mxu0 %v1320
    %1392 = vmatprep.subr.bf16.mxu0 %v1319
    %1393 = vmatpush1.bf16.msra.mxu0 %v1318
    %1394 = vmatprep.subr.bf16.mxu0 %v1317
    %1395 = vmatpush1.bf16.msra.mxu0 %v1316
    %1396 = vmatprep.subr.bf16.mxu0 %v1347
    %1397 = vmatpush2.bf16.msra.mxu0 %v1346
    %1398 = vmatprep.subr.bf16.mxu0 %v1345
    %1399 = vmatpush2.bf16.msra.mxu0 %v1344
    %1400 = vmatprep.subr.bf16.mxu0 %v1343
    %1401 = vmatpush2.bf16.msra.mxu0 %v1342
    %1402 = vmatprep.subr.bf16.mxu0 %v1341
    %1403 = vmatpush2.bf16.msra.mxu0 %v1340
    %1404 = vmatprep.subr.bf16.mxu0 %v1339
    %1405 = vmatpush2.bf16.msra.mxu0 %v1338
    %1406 = vmatprep.subr.bf16.mxu0 %v1337
    %1407 = vmatpush2.bf16.msra.mxu0 %v1336
    %1408 = vmatprep.subr.bf16.mxu0 %v1335
    %1409 = vmatpush2.bf16.msra.mxu0 %v1334
    %1410 = vmatprep.subr.bf16.mxu0 %v1333
    %1411 = vmatpush2.bf16.msra.mxu0 %v1332
    %1412 = vmatprep.mubr.bf16.mxu0 %v1155
    %1413 = vmatmul.mubr.bf16.gmra.mxu0 %v1154
    %v1414 = vpop.f32.mrf.mxu0
    %v1415 = vadd.f32 0.0, %v1414
    %v1416 = vpop.f32.mrf.mxu0
    %v1417 = vadd.f32 0.0, %v1416
    %v1418 = vpop.f32.mrf.mxu0
    %v1419 = vadd.f32 0.0, %v1418
    %v1420 = vpop.f32.mrf.mxu0
    %v1421 = vadd.f32 0.0, %v1420
    %1422 = vdwg.mxu0
    %v1455 = vunpack.c.l.b16 %v1156
    %v1456 = vunpack.c.h.b16 %v1156
    %v1457 = vunpack.c.l.b16 %v1157
    %v1458 = vunpack.c.h.b16 %v1157
    %v1459 = vunpack.c.l.b16 %v1158
    %v1460 = vunpack.c.h.b16 %v1158
    %v1461 = vunpack.c.l.b16 %v1159
    %v1462 = vunpack.c.h.b16 %v1159
    %v1463 = vunpack.c.l.b16 %v1160
    %v1464 = vunpack.c.h.b16 %v1160
    %v1465 = vunpack.c.l.b16 %v1161
    %v1466 = vunpack.c.h.b16 %v1161
    %v1467 = vunpack.c.l.b16 %v1162
    %v1468 = vunpack.c.h.b16 %v1162
    %v1469 = vunpack.c.l.b16 %v1163
    %v1470 = vunpack.c.h.b16 %v1163
    %v1471 = vunpack.c.l.b16 %v1164
    %v1472 = vunpack.c.h.b16 %v1164
    %v1473 = vunpack.c.l.b16 %v1165
    %v1474 = vunpack.c.h.b16 %v1165
    %v1475 = vunpack.c.l.b16 %v1166
    %v1476 = vunpack.c.h.b16 %v1166
    %v1477 = vunpack.c.l.b16 %v1167
    %v1478 = vunpack.c.h.b16 %v1167
    %v1479 = vunpack.c.l.b16 %v1168
    %v1480 = vunpack.c.h.b16 %v1168
    %v1481 = vunpack.c.l.b16 %v1169
    %v1482 = vunpack.c.h.b16 %v1169
    %v1483 = vunpack.c.l.b16 %v1170
    %v1484 = vunpack.c.h.b16 %v1170
    %v1485 = vunpack.c.l.b16 %v1171
    %v1486 = vunpack.c.h.b16 %v1171
    %v1487 = vunpack.c.l.b16 %v1172
    %v1488 = vunpack.c.h.b16 %v1172
    %v1489 = vunpack.c.l.b16 %v1173
    %v1490 = vunpack.c.h.b16 %v1173
    %v1491 = vunpack.c.l.b16 %v1174
    %v1492 = vunpack.c.h.b16 %v1174
    %v1493 = vunpack.c.l.b16 %v1175
    %v1494 = vunpack.c.h.b16 %v1175
    %v1495 = vunpack.c.l.b16 %v1176
    %v1496 = vunpack.c.h.b16 %v1176
    %v1497 = vunpack.c.l.b16 %v1177
    %v1498 = vunpack.c.h.b16 %v1177
    %v1499 = vunpack.c.l.b16 %v1178
    %v1500 = vunpack.c.h.b16 %v1178
    %v1501 = vunpack.c.l.b16 %v1179
    %v1502 = vunpack.c.h.b16 %v1179
    %v1503 = vunpack.c.l.b16 %v1180
    %v1504 = vunpack.c.h.b16 %v1180
    %v1505 = vunpack.c.l.b16 %v1181
    %v1506 = vunpack.c.h.b16 %v1181
    %v1507 = vunpack.c.l.b16 %v1182
    %v1508 = vunpack.c.h.b16 %v1182
    %v1509 = vunpack.c.l.b16 %v1183
    %v1510 = vunpack.c.h.b16 %v1183
    %v1511 = vunpack.c.l.b16 %v1184
    %v1512 = vunpack.c.h.b16 %v1184
    %v1513 = vunpack.c.l.b16 %v1185
    %v1514 = vunpack.c.h.b16 %v1185
    %v1515 = vunpack.c.l.b16 %v1186
    %v1516 = vunpack.c.h.b16 %v1186
    %v1517 = vunpack.c.l.b16 %v1187
    %v1518 = vunpack.c.h.b16 %v1187
    %v1519 = vpack.c.b16 %v1457, %v1455
    %v1520 = vpack.c.b16 %v1458, %v1456
    %v1521 = vpack.c.b16 %v1461, %v1459
    %v1522 = vpack.c.b16 %v1462, %v1460
    %v1523 = vpack.c.b16 %v1465, %v1463
    %v1524 = vpack.c.b16 %v1466, %v1464
    %v1525 = vpack.c.b16 %v1469, %v1467
    %v1526 = vpack.c.b16 %v1470, %v1468
    %v1527 = vpack.c.b16 %v1473, %v1471
    %v1528 = vpack.c.b16 %v1474, %v1472
    %v1529 = vpack.c.b16 %v1477, %v1475
    %v1530 = vpack.c.b16 %v1478, %v1476
    %v1531 = vpack.c.b16 %v1481, %v1479
    %v1532 = vpack.c.b16 %v1482, %v1480
    %v1533 = vpack.c.b16 %v1485, %v1483
    %v1534 = vpack.c.b16 %v1486, %v1484
    %v1535 = vpack.c.b16 %v1489, %v1487
    %v1536 = vpack.c.b16 %v1490, %v1488
    %v1537 = vpack.c.b16 %v1493, %v1491
    %v1538 = vpack.c.b16 %v1494, %v1492
    %v1539 = vpack.c.b16 %v1497, %v1495
    %v1540 = vpack.c.b16 %v1498, %v1496
    %v1541 = vpack.c.b16 %v1501, %v1499
    %v1542 = vpack.c.b16 %v1502, %v1500
    %v1543 = vpack.c.b16 %v1505, %v1503
    %v1544 = vpack.c.b16 %v1506, %v1504
    %v1545 = vpack.c.b16 %v1509, %v1507
    %v1546 = vpack.c.b16 %v1510, %v1508
    %v1547 = vpack.c.b16 %v1513, %v1511
    %v1548 = vpack.c.b16 %v1514, %v1512
    %v1549 = vpack.c.b16 %v1517, %v1515
    %v1550 = vpack.c.b16 %v1518, %v1516
    %1583 = vmatprep.subr.bf16.mxu0 %v1534
    %1584 = vmatpush1.bf16.msra.mxu0 %v1533
    %1585 = vmatprep.subr.bf16.mxu0 %v1532
    %1586 = vmatpush1.bf16.msra.mxu0 %v1531
    %1587 = vmatprep.subr.bf16.mxu0 %v1530
    %1588 = vmatpush1.bf16.msra.mxu0 %v1529
    %1589 = vmatprep.subr.bf16.mxu0 %v1528
    %1590 = vmatpush1.bf16.msra.mxu0 %v1527
    %1591 = vmatprep.subr.bf16.mxu0 %v1526
    %1592 = vmatpush1.bf16.msra.mxu0 %v1525
    %1593 = vmatprep.subr.bf16.mxu0 %v1524
    %1594 = vmatpush1.bf16.msra.mxu0 %v1523
    %1595 = vmatprep.subr.bf16.mxu0 %v1522
    %1596 = vmatpush1.bf16.msra.mxu0 %v1521
    %1597 = vmatprep.subr.bf16.mxu0 %v1520
    %1598 = vmatpush1.bf16.msra.mxu0 %v1519
    %1599 = vmatprep.subr.bf16.mxu0 %v1550
    %1600 = vmatpush2.bf16.msra.mxu0 %v1549
    %1601 = vmatprep.subr.bf16.mxu0 %v1548
    %1602 = vmatpush2.bf16.msra.mxu0 %v1547
    %1603 = vmatprep.subr.bf16.mxu0 %v1546
    %1604 = vmatpush2.bf16.msra.mxu0 %v1545
    %1605 = vmatprep.subr.bf16.mxu0 %v1544
    %1606 = vmatpush2.bf16.msra.mxu0 %v1543
    %1607 = vmatprep.subr.bf16.mxu0 %v1542
    %1608 = vmatpush2.bf16.msra.mxu0 %v1541
    %1609 = vmatprep.subr.bf16.mxu0 %v1540
    %1610 = vmatpush2.bf16.msra.mxu0 %v1539
    %1611 = vmatprep.subr.bf16.mxu0 %v1538
    %1612 = vmatpush2.bf16.msra.mxu0 %v1537
    %1613 = vmatprep.subr.bf16.mxu0 %v1536
    %1614 = vmatpush2.bf16.msra.mxu0 %v1535
    %1615 = vmatprep.mubr.bf16.mxu0 %v1153
    %1616 = vmatmul.mubr.bf16.gmra.mxu0 %v1152
    %v1617 = vpop.f32.mrf.mxu0
    %v1618 = vadd.f32 %v1415, %v1617
    %v1619 = vpop.f32.mrf.mxu0
    %v1620 = vadd.f32 %v1417, %v1619
    %v1621 = vpop.f32.mrf.mxu0
    %v1622 = vadd.f32 %v1419, %v1621
    %v1623 = vpop.f32.mrf.mxu0
    %v1624 = vadd.f32 %v1421, %v1623
    %1625 = vdwg.mxu0
    %v1626 = vld [vmem:[%s6] sm:$0xf]
    %v1627 = vpack.c.b16 %v178, %v178
    %v1628 = vpack.c.b16 %v179, %v179
    %vm1629 = vcmask 64512
    %v1631 = vsel %vm1629, %v1626, 0
    %vm1633 = vcmask 1043456
    %v1635 = vsel %vm1633, %v1627, 0
    %v1638 = vsel %vm1633, %v1628, 0
    %1640 = vmatprep.subr.bf16.mxu0 0
    %1641 = vmatpush1.bf16.msra.mxu0 0
    %1642 = vmatprep.subr.bf16.mxu0 0
    %1643 = vmatpush1.bf16.msra.mxu0 0
    %1644 = vmatprep.subr.bf16.mxu0 0
    %1645 = vmatpush1.bf16.msra.mxu0 0
    %1646 = vmatprep.subr.bf16.mxu0 0
    %1647 = vmatpush1.bf16.msra.mxu0 0
    %1648 = vmatprep.subr.bf16.mxu0 0
    %1649 = vmatpush1.bf16.msra.mxu0 0
    %1650 = vmatprep.subr.bf16.mxu0 0
    %1651 = vmatpush1.bf16.msra.mxu0 0
    %1652 = vmatprep.subr.bf16.mxu0 0
    %1653 = vmatpush1.bf16.msra.mxu0 0
    %1654 = vmatprep.subr.bf16.mxu0 %v1638
    %1655 = vmatpush1.bf16.msra.mxu0 %v1635
    %1656 = vmatprep.subr.bf16.mxu0 0
    %1657 = vmatpush2.bf16.msra.mxu0 0
    %1658 = vmatprep.subr.bf16.mxu0 0
    %1659 = vmatpush2.bf16.msra.mxu0 0
    %1660 = vmatprep.subr.bf16.mxu0 0
    %1661 = vmatpush2.bf16.msra.mxu0 0
    %1662 = vmatprep.subr.bf16.mxu0 0
    %1663 = vmatpush2.bf16.msra.mxu0 0
    %1664 = vmatprep.subr.bf16.mxu0 0
    %1665 = vmatpush2.bf16.msra.mxu0 0
    %1666 = vmatprep.subr.bf16.mxu0 0
    %1667 = vmatpush2.bf16.msra.mxu0 0
    %1668 = vmatprep.subr.bf16.mxu0 0
    %1669 = vmatpush2.bf16.msra.mxu0 0
    %1670 = vmatprep.subr.bf16.mxu0 0
    %1671 = vmatpush2.bf16.msra.mxu0 0
    %1672 = vmatprep.mubr.bf16.mxu0 0
    %1673 = vmatmul.mubr.bf16.gmra.mxu0 %v1631
    %v1674 = vpop.f32.mrf.mxu0
    %v1675 = vadd.f32 0.0, %v1674
    %v1676 = vpop.f32.mrf.mxu0
    %v1677 = vadd.f32 0.0, %v1676
    %v1678 = vpop.f32.mrf.mxu0
    %v1679 = vpop.f32.mrf.mxu0
    %1680 = vdwg.mxu0
    %v1681 = vpack.c.b16 %v180, %v180
    %v1682 = vpack.c.b16 %v181, %v181
    %v1684 = vsel %vm1633, %v1681, 0
    %v1687 = vsel %vm1633, %v1682, 0
    %1689 = vmatprep.subr.bf16.mxu0 0
    %1690 = vmatpush1.bf16.msra.mxu0 0
    %1691 = vmatprep.subr.bf16.mxu0 0
    %1692 = vmatpush1.bf16.msra.mxu0 0
    %1693 = vmatprep.subr.bf16.mxu0 0
    %1694 = vmatpush1.bf16.msra.mxu0 0
    %1695 = vmatprep.subr.bf16.mxu0 0
    %1696 = vmatpush1.bf16.msra.mxu0 0
    %1697 = vmatprep.subr.bf16.mxu0 0
    %1698 = vmatpush1.bf16.msra.mxu0 0
    %1699 = vmatprep.subr.bf16.mxu0 0
    %1700 = vmatpush1.bf16.msra.mxu0 0
    %1701 = vmatprep.subr.bf16.mxu0 0
    %1702 = vmatpush1.bf16.msra.mxu0 0
    %1703 = vmatprep.subr.bf16.mxu0 %v1687
    %1704 = vmatpush1.bf16.msra.mxu0 %v1684
    %1705 = vmatprep.subr.bf16.mxu0 0
    %1706 = vmatpush2.bf16.msra.mxu0 0
    %1707 = vmatprep.subr.bf16.mxu0 0
    %1708 = vmatpush2.bf16.msra.mxu0 0
    %1709 = vmatprep.subr.bf16.mxu0 0
    %1710 = vmatpush2.bf16.msra.mxu0 0
    %1711 = vmatprep.subr.bf16.mxu0 0
    %1712 = vmatpush2.bf16.msra.mxu0 0
    %1713 = vmatprep.subr.bf16.mxu0 0
    %1714 = vmatpush2.bf16.msra.mxu0 0
    %1715 = vmatprep.subr.bf16.mxu0 0
    %1716 = vmatpush2.bf16.msra.mxu0 0
    %1717 = vmatprep.subr.bf16.mxu0 0
    %1718 = vmatpush2.bf16.msra.mxu0 0
    %1719 = vmatprep.subr.bf16.mxu0 0
    %1720 = vmatpush2.bf16.msra.mxu0 0
    %1721 = vmatprep.mubr.bf16.mxu0 0
    %1722 = vmatmul.mubr.bf16.gmra.mxu0 %v1631
    %v1723 = vpop.f32.mrf.mxu0
    %v1724 = vadd.f32 0.0, %v1723
    %v1725 = vpop.f32.mrf.mxu0
    %v1726 = vadd.f32 0.0, %v1725
    %v1727 = vpop.f32.mrf.mxu0
    %v1728 = vpop.f32.mrf.mxu0
    %1729 = vdwg.mxu0
    %v1730 = vadd.f32 %v1618, %v1675
    %v1731 = vadd.f32 %v1620, %v1677
    %v1732 = vadd.f32 %v1622, %v1724
    %v1733 = vadd.f32 %v1624, %v1726
    %v1734 = vmul.f32 %v1730, 0.5
    %v1735 = vmul.f32 %v1731, 0.5
    %v1736 = vmul.f32 %v1732, 0.5
    %v1737 = vmul.f32 %v1733, 0.5
    %v1738 = vmul.f32 %v1730, 0.044715
    %v1739 = vmul.f32 %v1731, 0.044715
    %v1740 = vmul.f32 %v1732, 0.044715
    %v1741 = vmul.f32 %v1733, 0.044715
    %v1742 = vmul.f32 %v1738, %v1730
    %v1743 = vmul.f32 %v1739, %v1731
    %v1744 = vmul.f32 %v1740, %v1732
    %v1745 = vmul.f32 %v1741, %v1733
    %v1746 = vmul.f32 %v1742, %v1730
    %v1747 = vmul.f32 %v1743, %v1731
    %v1748 = vmul.f32 %v1744, %v1732
    %v1749 = vmul.f32 %v1745, %v1733
    %v1750 = vadd.f32 %v1730, %v1746
    %v1751 = vadd.f32 %v1731, %v1747
    %v1752 = vadd.f32 %v1732, %v1748
    %v1753 = vadd.f32 %v1733, %v1749
    %v1754 = vmul.f32 %v1750, 0.7978846
    %v1755 = vmul.f32 %v1751, 0.7978846
    %v1756 = vmul.f32 %v1752, 0.7978846
    %v1757 = vmul.f32 %v1753, 0.7978846
    %v1758 = vtanh.pop %v1754
    %v1759 = vtanh.pop %v1755
    %v1760 = vtanh.pop %v1756
    %v1761 = vtanh.pop %v1757
    %v1762 = vadd.f32 %v1758, 1.0
    %v1763 = vadd.f32 %v1759, 1.0
    %v1764 = vadd.f32 %v1760, 1.0
    %v1765 = vadd.f32 %v1761, 1.0
    %v1766 = vmul.f32 %v1734, %v1762
    %v1767 = vmul.f32 %v1735, %v1763
    %v1768 = vmul.f32 %v1736, %v1764
    %v1769 = vmul.f32 %v1737, %v1765
    %v1770 = vpack.c.bf16 %v1768, %v1766
    %v1771 = vpack.c.bf16 %v1769, %v1767
    %v1774 = vunpack.c.l.b16 %v1770
    %v1775 = vunpack.c.l.b16 %v1771
    %v1776 = vunpack.c.h.b16 %v1770
    %v1777 = vunpack.c.h.b16 %v1771
    %v1778 = vpack.c.b16 %v1775, %v1774
    %v1779 = vpack.c.b16 %v1777, %v1776
    %1782 = vst [vmem:[#allocation13] sm:$0xff] %v1778
    %1783 = vst [vmem:[#allocation13 + $0x8] sm:$0xff] %v1779
    // Predicated region
    $region54: #{tpu_custom_call.1} parent=1 // pred_check
      _
    $region55: #{tpu_custom_call.1} parent=1 // pred_check_branch
      %1785 = sbr.rel (0) target = $region57
    $region56: #{tpu_custom_call.1} parent=1 // pred_region
      %s1787 = ssub.s32 256, 256
      %1788 = vsyncadd [#allocation4], %s1787
      %s1789 = sshll.u32 [#allocation13], 4
      %s1790 = int_to_ptr.vmem [resolvable:$true] %s1789
      %1795 = dma.vmem_to_hbm [thread:$0]  %s1790, 256, %s7, [#allocation4], 128, 128, 8
    $region57: #{tpu_custom_call.1} parent=1 // pred_fallthru
      _
    // Predicated region
    $region58: #{tpu_custom_call.1} parent=1 // pred_check
      _
    $region59: #{tpu_custom_call.1} parent=1 // pred_check_branch
      %1797 = sbr.rel (0) target = $region61
    $region60: #{tpu_custom_call.1} parent=1 // pred_region
      %1798 = dma.done [#allocation4], 256
    $region61: #{tpu_custom_call.1} parent=1 // pred_fallthru
      _
    %1799 = vsyncpa [#allocation3], 1
    %1800 = vsyncpa [#allocation6], 1
    %1801 = vsyncpa [#allocation9], 1
    %1802 = vsyncpa [#allocation12], 1
    %1803 = vsyncpa [#allocation4], 1

</llo_original>
